<compile_context>
chip_gen: v7x
topology: tpu7x:2x2x1
jax: 0.10.0
libtpu: 0.0.40
codegen_flags: <defaults>
</compile_context>

<pallas_src>
import jax
import jax.numpy as jnp
from jax.experimental import pallas as pl
from jax.experimental.pallas import tpu as pltpu


LANE = 128  # TPU lane width


def mlp_kernel(x_ref, w1_ref, b1_ref, w2_ref, b2_ref, w3_ref, b3_ref, o_ref):
    # hidden1 + ReLU  (dropout1 == identity in eval mode)
    h1 = jnp.dot(x_ref[...], w1_ref[...], preferred_element_type=jnp.float32)
    h1 = jnp.maximum(h1 + b1_ref[...], 0.0)
    # hidden2 + ReLU  (dropout2 == identity in eval mode)
    h2 = jnp.dot(h1.astype(w2_ref.dtype), w2_ref[...],
                 preferred_element_type=jnp.float32)
    h2 = jnp.maximum(h2 + b2_ref[...], 0.0)
    # output layer
    out = jnp.dot(h2.astype(w3_ref.dtype), w3_ref[...],
                  preferred_element_type=jnp.float32)
    o_ref[...] = (out + b3_ref[...]).astype(o_ref.dtype)


def _round_up(x, m):
    return ((x + m - 1) // m) * m


def _pad2d(a, rows, cols):
    r, c = a.shape
    return jnp.pad(a, ((0, rows - r), (0, cols - c)))


def my_xxxnet_forward(x, params, *, block_m=None):
    """x: (B, 3, 32, 32) float32 NCHW.  Returns (B, n_output) float32."""
    w1, b1, w2, b2, w3, b3 = params
    n_input = w1.shape[0]
    n_hidden = w1.shape[1]
    n_hidden2 = w2.shape[1]
    n_output = w3.shape[1]

    # Glue: flatten NCHW -> (B, 3072), same element order as torch .view(-1, 3072)
    x2d = x.reshape(-1, n_input)
    B = x2d.shape[0]

    # Lane-dense padded widths (output/hidden2 padded to 128 for unmasked stores).
    n_hidden_p = _round_up(max(n_hidden, LANE), LANE)
    n_hidden2_p = _round_up(max(n_hidden2, LANE), LANE)
    n_output_p = _round_up(max(n_output, LANE), LANE)

    # Batch tile: >=128 rows per step once the batch is big enough (MXU M-occupancy),
    # otherwise just round the small batch up to a sublane multiple (8).
    if block_m is None:
        block_m = 128 if B >= 128 else _round_up(B, 8)
    Bp = _round_up(B, block_m)

    # Operand prep: zero-pad, cast matmul operands to bf16, keep biases f32.
    x_p = jnp.pad(x2d, ((0, Bp - B), (0, 0))).astype(jnp.bfloat16)
    w1_p = _pad2d(w1, n_input, n_hidden_p).astype(jnp.bfloat16)
    b1_p = _pad2d(b1, 1, n_hidden_p).astype(jnp.float32)
    w2_p = _pad2d(w2, n_hidden_p, n_hidden2_p).astype(jnp.bfloat16)
    b2_p = _pad2d(b2, 1, n_hidden2_p).astype(jnp.float32)
    w3_p = _pad2d(w3, n_hidden2_p, n_output_p).astype(jnp.bfloat16)
    b3_p = _pad2d(b3, 1, n_output_p).astype(jnp.float32)

    grid = (Bp // block_m,)

    flops = 2 * Bp * (n_input * n_hidden_p
                      + n_hidden_p * n_hidden2_p
                      + n_hidden2_p * n_output_p)
    bytes_accessed = (x_p.size * 2
                      + (w1_p.size + w2_p.size + w3_p.size) * 2
                      + (b1_p.size + b2_p.size + b3_p.size) * 4
                      + Bp * n_output_p * 4)

    # Weights/biases: full-array blocks with a constant block index -> stay
    # VMEM-resident (not re-DMA'd every grid step).
    const = lambda shape: pl.BlockSpec(shape, lambda i: tuple(0 for _ in shape))

    out = pl.pallas_call(
        mlp_kernel,
        out_shape=jax.ShapeDtypeStruct((Bp, n_output_p), jnp.float32),
        grid_spec=pltpu.PrefetchScalarGridSpec(
            num_scalar_prefetch=0,
            grid=grid,
            in_specs=[
                pl.BlockSpec((block_m, n_input), lambda i: (i, 0)),
                const(w1_p.shape), const(b1_p.shape),
                const(w2_p.shape), const(b2_p.shape),
                const(w3_p.shape), const(b3_p.shape),
            ],
            out_specs=pl.BlockSpec((block_m, n_output_p), lambda i: (i, 0)),
        ),
        compiler_params=pltpu.CompilerParams(
            dimension_semantics=("parallel",)),
        cost_estimate=pl.CostEstimate(
            flops=int(flops), transcendentals=0,
            bytes_accessed=int(bytes_accessed)),
    )(x_p, w1_p, b1_p, w2_p, b2_p, w3_p, b3_p)

    return out[:B, :n_output]


def init_params(key, n_input, n_hidden, n_hidden2, n_output):
    """Deterministic synthetic parameters (shapes match torch.nn.Linear)."""
    ks = jax.random.split(key, 6)
    scale1 = 1.0 / jnp.sqrt(n_input)
    scale2 = 1.0 / jnp.sqrt(n_hidden)
    scale3 = 1.0 / jnp.sqrt(n_hidden2)
    # stored pre-transposed: (in, out)
    w1 = jax.random.uniform(ks[0], (n_input, n_hidden), jnp.float32, -scale1, scale1)
    b1 = jax.random.uniform(ks[1], (1, n_hidden), jnp.float32, -scale1, scale1)
    w2 = jax.random.uniform(ks[2], (n_hidden, n_hidden2), jnp.float32, -scale2, scale2)
    b2 = jax.random.uniform(ks[3], (1, n_hidden2), jnp.float32, -scale2, scale2)
    w3 = jax.random.uniform(ks[4], (n_hidden2, n_output), jnp.float32, -scale3, scale3)
    b3 = jax.random.uniform(ks[5], (1, n_output), jnp.float32, -scale3, scale3)
    return (w1, b1, w2, b2, w3, b3)


def reference_forward(x, params):
    """Pure-JAX reference mirroring the kernel's bf16-operand / f32-accumulate math."""
    w1, b1, w2, b2, w3, b3 = params
    x2d = x.reshape(-1, w1.shape[0]).astype(jnp.bfloat16)
    h1 = jnp.dot(x2d, w1.astype(jnp.bfloat16),
                 preferred_element_type=jnp.float32) + b1
    h1 = jnp.maximum(h1, 0.0)
    h2 = jnp.dot(h1.astype(jnp.bfloat16), w2.astype(jnp.bfloat16),
                 preferred_element_type=jnp.float32) + b2
    h2 = jnp.maximum(h2, 0.0)
    return jnp.dot(h2.astype(jnp.bfloat16), w3.astype(jnp.bfloat16),
                   preferred_element_type=jnp.float32) + b3


if __name__ == "__main__":
    # The forward pass hard-codes x.view(-1, 32*32*3), so n_input must be 3072.
    n_input, n_hidden, n_hidden2, n_output = 32 * 32 * 3, 128, 64, 10
    batch = 8

    key = jax.random.PRNGKey(0)
    kx, kp = jax.random.split(key)
    x = jax.random.normal(kx, (batch, 3, 32, 32), jnp.float32)   # NCHW like PyTorch
    params = init_params(kp, n_input, n_hidden, n_hidden2, n_output)

    out = my_xxxnet_forward(x, params)
    out = jax.block_until_ready(out)

    ref = reference_forward(x, params)
    assert out.shape == (batch, n_output)
    # bf16 operands -> tolerance loosened vs the old pure-f32 1e-4 check.
    assert jnp.allclose(out, ref, atol=1e-2, rtol=1e-2), "mismatch vs reference"

    print("KERNEL_OK")
</pallas_src>

<mosaic_0001>
module attributes {stable_mosaic.version = 11 : i64} {
  func.func @mlp_kernel(%arg0: i32, %arg1: memref<8x3072xbf16, #tpu.memory_space<vmem>>, %arg2: memref<3072x128xbf16, #tpu.memory_space<vmem>>, %arg3: memref<1x128xf32, #tpu.memory_space<vmem>>, %arg4: memref<128x128xbf16, #tpu.memory_space<vmem>>, %arg5: memref<1x128xf32, #tpu.memory_space<vmem>>, %arg6: memref<128x128xbf16, #tpu.memory_space<vmem>>, %arg7: memref<1x128xf32, #tpu.memory_space<vmem>>, %arg8: memref<8x128xf32, #tpu.memory_space<vmem>>) attributes {dimension_semantics = [#tpu.dimension_semantics<parallel>], iteration_bounds = array<i64: 1>, scalar_prefetch = 0 : i64, scratch_operands = 0 : i64, tpu.core_type = #tpu.core_type<tc>, window_params = [{transform_indices = @transform_0, window_bounds = array<i64: 8, 3072>}, {pipeline_mode = #tpu.pipeline_mode<synchronous>, transform_indices = @transform_1, window_bounds = array<i64: 3072, 128>}, {pipeline_mode = #tpu.pipeline_mode<synchronous>, transform_indices = @transform_2, window_bounds = array<i64: 1, 128>}, {pipeline_mode = #tpu.pipeline_mode<synchronous>, transform_indices = @transform_3, window_bounds = array<i64: 128, 128>}, {pipeline_mode = #tpu.pipeline_mode<synchronous>, transform_indices = @transform_4, window_bounds = array<i64: 1, 128>}, {pipeline_mode = #tpu.pipeline_mode<synchronous>, transform_indices = @transform_5, window_bounds = array<i64: 128, 128>}, {pipeline_mode = #tpu.pipeline_mode<synchronous>, transform_indices = @transform_6, window_bounds = array<i64: 1, 128>}, {transform_indices = @transform_7, window_bounds = array<i64: 8, 128>}]} {
    %c0 = arith.constant 0 : index
    %c0_0 = arith.constant 0 : index
    %0 = vector.load %arg1[%c0, %c0_0] : memref<8x3072xbf16, #tpu.memory_space<vmem>>, vector<8x3072xbf16>
    %c0_1 = arith.constant 0 : index
    %c0_2 = arith.constant 0 : index
    %1 = vector.load %arg2[%c0_1, %c0_2] : memref<3072x128xbf16, #tpu.memory_space<vmem>>, vector<3072x128xbf16>
    %cst = arith.constant dense<0.000000e+00> : vector<8x128xf32>
    %2 = tpu.matmul %0, %1, %cst {dimension_numbers = #tpu.dot_dimension_numbers<[1], [0], [0], [1], [0, 0, 1, 1], [], []>} : vector<8x3072xbf16>, vector<3072x128xbf16>, vector<8x128xf32> -> vector<8x128xf32>
    %c0_3 = arith.constant 0 : index
    %c0_4 = arith.constant 0 : index
    %3 = vector.load %arg3[%c0_3, %c0_4] : memref<1x128xf32, #tpu.memory_space<vmem>>, vector<1x128xf32>
    %4 = vector.broadcast %3 : vector<1x128xf32> to vector<8x128xf32>
    %5 = arith.addf %2, %4 : vector<8x128xf32>
    %cst_5 = arith.constant 0.000000e+00 : f32
    %6 = vector.broadcast %cst_5 : f32 to vector<8x128xf32>
    %7 = arith.maximumf %5, %6 : vector<8x128xf32>
    %8 = arith.truncf %7 : vector<8x128xf32> to vector<8x128xbf16>
    %c0_6 = arith.constant 0 : index
    %c0_7 = arith.constant 0 : index
    %9 = vector.load %arg4[%c0_6, %c0_7] : memref<128x128xbf16, #tpu.memory_space<vmem>>, vector<128x128xbf16>
    %cst_8 = arith.constant dense<0.000000e+00> : vector<8x128xf32>
    %10 = tpu.matmul %8, %9, %cst_8 {dimension_numbers = #tpu.dot_dimension_numbers<[1], [0], [0], [1], [0, 0, 1, 1], [], []>} : vector<8x128xbf16>, vector<128x128xbf16>, vector<8x128xf32> -> vector<8x128xf32>
    %c0_9 = arith.constant 0 : index
    %c0_10 = arith.constant 0 : index
    %11 = vector.load %arg5[%c0_9, %c0_10] : memref<1x128xf32, #tpu.memory_space<vmem>>, vector<1x128xf32>
    %12 = vector.broadcast %11 : vector<1x128xf32> to vector<8x128xf32>
    %13 = arith.addf %10, %12 : vector<8x128xf32>
    %cst_11 = arith.constant 0.000000e+00 : f32
    %14 = vector.broadcast %cst_11 : f32 to vector<8x128xf32>
    %15 = arith.maximumf %13, %14 : vector<8x128xf32>
    %16 = arith.truncf %15 : vector<8x128xf32> to vector<8x128xbf16>
    %c0_12 = arith.constant 0 : index
    %c0_13 = arith.constant 0 : index
    %17 = vector.load %arg6[%c0_12, %c0_13] : memref<128x128xbf16, #tpu.memory_space<vmem>>, vector<128x128xbf16>
    %cst_14 = arith.constant dense<0.000000e+00> : vector<8x128xf32>
    %18 = tpu.matmul %16, %17, %cst_14 {dimension_numbers = #tpu.dot_dimension_numbers<[1], [0], [0], [1], [0, 0, 1, 1], [], []>} : vector<8x128xbf16>, vector<128x128xbf16>, vector<8x128xf32> -> vector<8x128xf32>
    %c0_15 = arith.constant 0 : index
    %c0_16 = arith.constant 0 : index
    %19 = vector.load %arg7[%c0_15, %c0_16] : memref<1x128xf32, #tpu.memory_space<vmem>>, vector<1x128xf32>
    %20 = vector.broadcast %19 : vector<1x128xf32> to vector<8x128xf32>
    %21 = arith.addf %18, %20 : vector<8x128xf32>
    %c0_17 = arith.constant 0 : index
    %c0_18 = arith.constant 0 : index
    %22 = vector.load %arg8[%c0_17, %c0_18] : memref<8x128xf32, #tpu.memory_space<vmem>>, vector<8x128xf32>
    tpu.vector_store %arg8[%c0_17, %c0_18], %21 {strides = array<i32>} : memref<8x128xf32, #tpu.memory_space<vmem>>, vector<8x128xf32>,
    return
  }
  func.func @transform_0(%arg0: i32) -> (i32, i32) {
    %c0_i32 = arith.constant 0 : i32
    %c0_i32_0 = arith.constant 0 : i32
    return %arg0, %c0_i32 : i32, i32
  }
  func.func @transform_1(%arg0: i32) -> (i32, i32) {
    %c0_i32 = arith.constant 0 : i32
    %c0_i32_0 = arith.constant 0 : i32
    %c0_i32_1 = arith.constant 0 : i32
    return %c0_i32, %c0_i32_0 : i32, i32
  }
  func.func @transform_2(%arg0: i32) -> (i32, i32) {
    %c0_i32 = arith.constant 0 : i32
    %c0_i32_0 = arith.constant 0 : i32
    %c0_i32_1 = arith.constant 0 : i32
    return %c0_i32, %c0_i32_0 : i32, i32
  }
  func.func @transform_3(%arg0: i32) -> (i32, i32) {
    %c0_i32 = arith.constant 0 : i32
    %c0_i32_0 = arith.constant 0 : i32
    %c0_i32_1 = arith.constant 0 : i32
    return %c0_i32, %c0_i32_0 : i32, i32
  }
  func.func @transform_4(%arg0: i32) -> (i32, i32) {
    %c0_i32 = arith.constant 0 : i32
    %c0_i32_0 = arith.constant 0 : i32
    %c0_i32_1 = arith.constant 0 : i32
    return %c0_i32, %c0_i32_0 : i32, i32
  }
  func.func @transform_5(%arg0: i32) -> (i32, i32) {
    %c0_i32 = arith.constant 0 : i32
    %c0_i32_0 = arith.constant 0 : i32
    %c0_i32_1 = arith.constant 0 : i32
    return %c0_i32, %c0_i32_0 : i32, i32
  }
  func.func @transform_6(%arg0: i32) -> (i32, i32) {
    %c0_i32 = arith.constant 0 : i32
    %c0_i32_0 = arith.constant 0 : i32
    %c0_i32_1 = arith.constant 0 : i32
    return %c0_i32, %c0_i32_0 : i32, i32
  }
  func.func @transform_7(%arg0: i32) -> (i32, i32) {
    %c0_i32 = arith.constant 0 : i32
    %c0_i32_0 = arith.constant 0 : i32
    return %arg0, %c0_i32 : i32, i32
  }
}

</mosaic_0001>

<llo_original>
// kernel: tpu_custom_call.1
$region0: #{tpu_custom_call.1}
  #allocation0 [shape = 'u32[]', space=smem, size = 0x4, offset = 0x4, fixed_abs, tag = 'smem constant byte address 0x4 - core index']
  #allocation1 [shape = 'u32[144,128]{1,0:T(1,128)}', space=vmem, size = 0x12000, scoped, tag = 'internal scratch']
  %s0 = inlined_call_operand.hbm [shape: bf16[8,3072], index: 0, kind: input, shape index: {}]
  %s1 = inlined_call_operand.hbm [shape: bf16[3072,128], index: 1, kind: input, shape index: {}]
  %s2 = inlined_call_operand.vmem [shape: f32[1,128], index: 2, kind: input, shape index: {}]
  %s3 = inlined_call_operand.hbm [shape: bf16[128,128], index: 3, kind: input, shape index: {}]
  %s4 = inlined_call_operand.vmem [shape: f32[1,128], index: 4, kind: input, shape index: {}]
  %s5 = inlined_call_operand.hbm [shape: bf16[128,128], index: 5, kind: input, shape index: {}]
  %s6 = inlined_call_operand.vmem [shape: f32[1,128], index: 6, kind: input, shape index: {}]
  %s7 = inlined_call_operand.hbm [shape: f32[8,128], index: 7, kind: output, shape index: {}]
  %s8 = sld [smem:[#allocation0]]
  $region54: #{tpu_custom_call.1} parent=0
    _
  %s10 = ssub.s32 1, %s8
  %s11 = scalar_select 0, %s10, %s8
  $region1: #{tpu_custom_call.1} parent=0
    #allocation2 [shape = 'u8[49152]{0}', space=vmem, size = 0xc000, scoped, tag = 'input window, operand 0, single buffered']
    #allocation3 [shape = 's32[1]{0}', space=sflag, size = 0x4, scoped, tag = 'scoped memory for tpu_custom_call.1']
    #allocation4 [shape = 's32[1]{0}', space=sflag, size = 0x4, scoped, tag = 'scoped memory for tpu_custom_call.1']
    #allocation5 [shape = 'u8[786432]{0}', space=vmem, size = 0xc0000, scoped, tag = 'input window, operand 1, single buffered']
    #allocation6 [shape = 's32[1]{0}', space=sflag, size = 0x4, scoped, tag = 'scoped memory for tpu_custom_call.1']
    #allocation7 [shape = 'u8[32768]{0}', space=vmem, size = 0x8000, scoped, tag = 'input window, operand 3, single buffered']
    #allocation8 [shape = 'u8[32768]{0}', space=vmem, size = 0x8000, scoped, tag = 'input window, operand 5, single buffered']
    #allocation9 [shape = 's32[1]{0}', space=sflag, size = 0x4, scoped, tag = 'scoped memory for tpu_custom_call.1']
    #allocation10 [shape = 'u8[4096]{0}', space=vmem, size = 0x1000, scoped, tag = 'output window, operand 0, single buffered']
    %12 = vsyncpa [#allocation3], 0
    %13 = vsyncpa [#allocation6], 0
    %14 = vsyncpa [#allocation9], 0
    %15 = vsyncpa [#allocation4], 0
    // Predicated region
    $region2: #{tpu_custom_call.1} parent=1 // pred_check
      _
    $region3: #{tpu_custom_call.1} parent=1 // pred_check_branch
      %17 = sbr.rel (0) target = $region5
    $region4: #{tpu_custom_call.1} parent=1 // pred_region
      %s19 = ssub.s32 1536, 1536
      %20 = vsyncadd [#allocation3], %s19
      %s22 = sshll.u32 [#allocation2], 4
      %s23 = int_to_ptr.vmem [resolvable:$true] %s22
      %25 = dma.hbm_to_vmem [thread:$0]  %s0, 1536, %s23, [#allocation3]
    $region5: #{tpu_custom_call.1} parent=1 // pred_fallthru
      _
    // Predicated region
    $region6: #{tpu_custom_call.1} parent=1 // pred_check
      _
    $region7: #{tpu_custom_call.1} parent=1 // pred_check_branch
      %27 = sbr.rel (0) target = $region9
    $region8: #{tpu_custom_call.1} parent=1 // pred_region
      %s29 = ssub.s32 24576, 24576
      %30 = vsyncadd [#allocation6], %s29
      %s31 = sshll.u32 [#allocation5], 4
      %s32 = int_to_ptr.vmem [resolvable:$true] %s31
      %37 = dma.hbm_to_vmem [thread:$0]  %s1, 24576, %s32, [#allocation6], 64, 64, 4
    $region9: #{tpu_custom_call.1} parent=1 // pred_fallthru
      _
    // Predicated region
    $region10: #{tpu_custom_call.1} parent=1 // pred_check
      _
    $region11: #{tpu_custom_call.1} parent=1 // pred_check_branch
      %39 = sbr.rel (0) target = $region13
    $region12: #{tpu_custom_call.1} parent=1 // pred_region
      _
    $region13: #{tpu_custom_call.1} parent=1 // pred_fallthru
      _
    // Predicated region
    $region14: #{tpu_custom_call.1} parent=1 // pred_check
      _
    $region15: #{tpu_custom_call.1} parent=1 // pred_check_branch
      %41 = sbr.rel (0) target = $region17
    $region16: #{tpu_custom_call.1} parent=1 // pred_region
      %s43 = ssub.s32 1024, 1024
      %44 = vsyncadd [#allocation6], %s43
      %s45 = sshll.u32 [#allocation7], 4
      %s46 = int_to_ptr.vmem [resolvable:$true] %s45
      %51 = dma.hbm_to_vmem [thread:$0]  %s3, 1024, %s46, [#allocation6], 64, 64, 4
    $region17: #{tpu_custom_call.1} parent=1 // pred_fallthru
      _
    // Predicated region
    $region18: #{tpu_custom_call.1} parent=1 // pred_check
      _
    $region19: #{tpu_custom_call.1} parent=1 // pred_check_branch
      %53 = sbr.rel (0) target = $region21
    $region20: #{tpu_custom_call.1} parent=1 // pred_region
      _
    $region21: #{tpu_custom_call.1} parent=1 // pred_fallthru
      _
    // Predicated region
    $region22: #{tpu_custom_call.1} parent=1 // pred_check
      _
    $region23: #{tpu_custom_call.1} parent=1 // pred_check_branch
      %55 = sbr.rel (0) target = $region25
    $region24: #{tpu_custom_call.1} parent=1 // pred_region
      %s57 = ssub.s32 1024, 1024
      %58 = vsyncadd [#allocation9], %s57
      %s59 = sshll.u32 [#allocation8], 4
      %s60 = int_to_ptr.vmem [resolvable:$true] %s59
      %65 = dma.hbm_to_vmem [thread:$0]  %s5, 1024, %s60, [#allocation9], 64, 64, 4
    $region25: #{tpu_custom_call.1} parent=1 // pred_fallthru
      _
    // Predicated region
    $region26: #{tpu_custom_call.1} parent=1 // pred_check
      _
    $region27: #{tpu_custom_call.1} parent=1 // pred_check_branch
      %67 = sbr.rel (0) target = $region29
    $region28: #{tpu_custom_call.1} parent=1 // pred_region
      _
    $region29: #{tpu_custom_call.1} parent=1 // pred_fallthru
      _
    // Predicated region
    $region30: #{tpu_custom_call.1} parent=1 // pred_check
      _
    $region31: #{tpu_custom_call.1} parent=1 // pred_check_branch
      %69 = sbr.rel (0) target = $region33
    $region32: #{tpu_custom_call.1} parent=1 // pred_region
      %70 = dma.done [#allocation3], 1536
    $region33: #{tpu_custom_call.1} parent=1 // pred_fallthru
      _
    // Predicated region
    $region34: #{tpu_custom_call.1} parent=1 // pred_check
      _
    $region35: #{tpu_custom_call.1} parent=1 // pred_check_branch
      %72 = sbr.rel (0) target = $region37
    $region36: #{tpu_custom_call.1} parent=1 // pred_region
      %73 = dma.done [#allocation6], 24576
    $region37: #{tpu_custom_call.1} parent=1 // pred_fallthru
      _
    // Predicated region
    $region38: #{tpu_custom_call.1} parent=1 // pred_check
      _
    $region39: #{tpu_custom_call.1} parent=1 // pred_check_branch
      %75 = sbr.rel (0) target = $region41
    $region40: #{tpu_custom_call.1} parent=1 // pred_region
      %76 = dma.done [#allocation6], 1024
    $region41: #{tpu_custom_call.1} parent=1 // pred_fallthru
      _
    // Predicated region
    $region42: #{tpu_custom_call.1} parent=1 // pred_check
      _
    $region43: #{tpu_custom_call.1} parent=1 // pred_check_branch
      %78 = sbr.rel (0) target = $region45
    $region44: #{tpu_custom_call.1} parent=1 // pred_region
      %79 = dma.done [#allocation9], 1024
    $region45: #{tpu_custom_call.1} parent=1 // pred_fallthru
      _
    %v81 = vld [vmem:[#allocation2] sm:$0xff]
    %v82 = vld [vmem:[#allocation2 + $0x8] sm:$0xff]
    %v83 = vld [vmem:[#allocation2 + $0x10] sm:$0xff]
    %v84 = vld [vmem:[#allocation2 + $0x18] sm:$0xff]
    %v85 = vld [vmem:[#allocation2 + $0x20] sm:$0xff]
    %v86 = vld [vmem:[#allocation2 + $0x28] sm:$0xff]
    %v87 = vld [vmem:[#allocation2 + $0x30] sm:$0xff]
    %v88 = vld [vmem:[#allocation2 + $0x38] sm:$0xff]
    %v89 = vld [vmem:[#allocation2 + $0x40] sm:$0xff]
    %v90 = vld [vmem:[#allocation2 + $0x48] sm:$0xff]
    %v91 = vld [vmem:[#allocation2 + $0x50] sm:$0xff]
    %v92 = vld [vmem:[#allocation2 + $0x58] sm:$0xff]
    %v93 = vld [vmem:[#allocation5] sm:$0xf]
    %v94 = vld [vmem:[#allocation5 + $0x4] sm:$0xf]
    %v95 = vld [vmem:[#allocation5 + $0x8] sm:$0xf]
    %v96 = vld [vmem:[#allocation5 + $0xc] sm:$0xf]
    %v97 = vld [vmem:[#allocation5 + $0x10] sm:$0xf]
    %v98 = vld [vmem:[#allocation5 + $0x14] sm:$0xf]
    %v99 = vld [vmem:[#allocation5 + $0x18] sm:$0xf]
    %v100 = vld [vmem:[#allocation5 + $0x1c] sm:$0xf]
    %v101 = vld [vmem:[#allocation5 + $0x20] sm:$0xf]
    %v102 = vld [vmem:[#allocation5 + $0x24] sm:$0xf]
    %v103 = vld [vmem:[#allocation5 + $0x28] sm:$0xf]
    %v104 = vld [vmem:[#allocation5 + $0x2c] sm:$0xf]
    %v105 = vld [vmem:[#allocation5 + $0x30] sm:$0xf]
    %v106 = vld [vmem:[#allocation5 + $0x34] sm:$0xf]
    %v107 = vld [vmem:[#allocation5 + $0x38] sm:$0xf]
    %v108 = vld [vmem:[#allocation5 + $0x3c] sm:$0xf]
    %v109 = vld [vmem:[#allocation5 + $0x40] sm:$0xf]
    %v110 = vld [vmem:[#allocation5 + $0x44] sm:$0xf]
    %v111 = vld [vmem:[#allocation5 + $0x48] sm:$0xf]
    %v112 = vld [vmem:[#allocation5 + $0x4c] sm:$0xf]
    %v113 = vld [vmem:[#allocation5 + $0x50] sm:$0xf]
    %v114 = vld [vmem:[#allocation5 + $0x54] sm:$0xf]
    %v115 = vld [vmem:[#allocation5 + $0x58] sm:$0xf]
    %v116 = vld [vmem:[#allocation5 + $0x5c] sm:$0xf]
    %v117 = vld [vmem:[#allocation5 + $0x60] sm:$0xf]
    %v118 = vld [vmem:[#allocation5 + $0x64] sm:$0xf]
    %v119 = vld [vmem:[#allocation5 + $0x68] sm:$0xf]
    %v120 = vld [vmem:[#allocation5 + $0x6c] sm:$0xf]
    %v121 = vld [vmem:[#allocation5 + $0x70] sm:$0xf]
    %v122 = vld [vmem:[#allocation5 + $0x74] sm:$0xf]
    %v123 = vld [vmem:[#allocation5 + $0x78] sm:$0xf]
    %v124 = vld [vmem:[#allocation5 + $0x7c] sm:$0xf]
    %v125 = vld [vmem:[#allocation5 + $0x80] sm:$0xf]
    %v126 = vld [vmem:[#allocation5 + $0x84] sm:$0xf]
    %v127 = vld [vmem:[#allocation5 + $0x88] sm:$0xf]
    %v128 = vld [vmem:[#allocation5 + $0x8c] sm:$0xf]
    %v129 = vld [vmem:[#allocation5 + $0x90] sm:$0xf]
    %v130 = vld [vmem:[#allocation5 + $0x94] sm:$0xf]
    %v131 = vld [vmem:[#allocation5 + $0x98] sm:$0xf]
    %v132 = vld [vmem:[#allocation5 + $0x9c] sm:$0xf]
    %v133 = vld [vmem:[#allocation5 + $0xa0] sm:$0xf]
    %v134 = vld [vmem:[#allocation5 + $0xa4] sm:$0xf]
    %v135 = vld [vmem:[#allocation5 + $0xa8] sm:$0xf]
    %v136 = vld [vmem:[#allocation5 + $0xac] sm:$0xf]
    %v137 = vld [vmem:[#allocation5 + $0xb0] sm:$0xf]
    %v138 = vld [vmem:[#allocation5 + $0xb4] sm:$0xf]
    %v139 = vld [vmem:[#allocation5 + $0xb8] sm:$0xf]
    %v140 = vld [vmem:[#allocation5 + $0xbc] sm:$0xf]
    %v141 = vld [vmem:[#allocation5 + $0xc0] sm:$0xf]
    %v142 = vld [vmem:[#allocation5 + $0xc4] sm:$0xf]
    %v143 = vld [vmem:[#allocation5 + $0xc8] sm:$0xf]
    %v144 = vld [vmem:[#allocation5 + $0xcc] sm:$0xf]
    %v145 = vld [vmem:[#allocation5 + $0xd0] sm:$0xf]
    %v146 = vld [vmem:[#allocation5 + $0xd4] sm:$0xf]
    %v147 = vld [vmem:[#allocation5 + $0xd8] sm:$0xf]
    %v148 = vld [vmem:[#allocation5 + $0xdc] sm:$0xf]
    %v149 = vld [vmem:[#allocation5 + $0xe0] sm:$0xf]
    %v150 = vld [vmem:[#allocation5 + $0xe4] sm:$0xf]
    %v151 = vld [vmem:[#allocation5 + $0xe8] sm:$0xf]
    %v152 = vld [vmem:[#allocation5 + $0xec] sm:$0xf]
    %v153 = vld [vmem:[#allocation5 + $0xf0] sm:$0xf]
    %v154 = vld [vmem:[#allocation5 + $0xf4] sm:$0xf]
    %v155 = vld [vmem:[#allocation5 + $0xf8] sm:$0xf]
    %v156 = vld [vmem:[#allocation5 + $0xfc] sm:$0xf]
    %v157 = vld [vmem:[#allocation5 + $0x100] sm:$0xf]
    %v158 = vld [vmem:[#allocation5 + $0x104] sm:$0xf]
    %v159 = vld [vmem:[#allocation5 + $0x108] sm:$0xf]
    %v160 = vld [vmem:[#allocation5 + $0x10c] sm:$0xf]
    %v161 = vld [vmem:[#allocation5 + $0x110] sm:$0xf]
    %v162 = vld [vmem:[#allocation5 + $0x114] sm:$0xf]
    %v163 = vld [vmem:[#allocation5 + $0x118] sm:$0xf]
    %v164 = vld [vmem:[#allocation5 + $0x11c] sm:$0xf]
    %v165 = vld [vmem:[#allocation5 + $0x120] sm:$0xf]
    %v166 = vld [vmem:[#allocation5 + $0x124] sm:$0xf]
    %v167 = vld [vmem:[#allocation5 + $0x128] sm:$0xf]
    %v168 = vld [vmem:[#allocation5 + $0x12c] sm:$0xf]
    %v169 = vld [vmem:[#allocation5 + $0x130] sm:$0xf]
    %v170 = vld [vmem:[#allocation5 + $0x134] sm:$0xf]
    %v171 = vld [vmem:[#allocation5 + $0x138] sm:$0xf]
    %v172 = vld [vmem:[#allocation5 + $0x13c] sm:$0xf]
    %v173 = vld [vmem:[#allocation5 + $0x140] sm:$0xf]
    %v174 = vld [vmem:[#allocation5 + $0x144] sm:$0xf]
    %v175 = vld [vmem:[#allocation5 + $0x148] sm:$0xf]
    %v176 = vld [vmem:[#allocation5 + $0x14c] sm:$0xf]
    %v177 = vld [vmem:[#allocation5 + $0x150] sm:$0xf]
    %v178 = vld [vmem:[#allocation5 + $0x154] sm:$0xf]
    %v179 = vld [vmem:[#allocation5 + $0x158] sm:$0xf]
    %v180 = vld [vmem:[#allocation5 + $0x15c] sm:$0xf]
    %v181 = vld [vmem:[#allocation5 + $0x160] sm:$0xf]
    %v182 = vld [vmem:[#allocation5 + $0x164] sm:$0xf]
    %v183 = vld [vmem:[#allocation5 + $0x168] sm:$0xf]
    %v184 = vld [vmem:[#allocation5 + $0x16c] sm:$0xf]
    %v185 = vld [vmem:[#allocation5 + $0x170] sm:$0xf]
    %v186 = vld [vmem:[#allocation5 + $0x174] sm:$0xf]
    %v187 = vld [vmem:[#allocation5 + $0x178] sm:$0xf]
    %v188 = vld [vmem:[#allocation5 + $0x17c] sm:$0xf]
    %v189 = vld [vmem:[#allocation5 + $0x180] sm:$0xf]
    %v190 = vld [vmem:[#allocation5 + $0x184] sm:$0xf]
    %v191 = vld [vmem:[#allocation5 + $0x188] sm:$0xf]
    %v192 = vld [vmem:[#allocation5 + $0x18c] sm:$0xf]
    %v193 = vld [vmem:[#allocation5 + $0x190] sm:$0xf]
    %v194 = vld [vmem:[#allocation5 + $0x194] sm:$0xf]
    %v195 = vld [vmem:[#allocation5 + $0x198] sm:$0xf]
    %v196 = vld [vmem:[#allocation5 + $0x19c] sm:$0xf]
    %v197 = vld [vmem:[#allocation5 + $0x1a0] sm:$0xf]
    %v198 = vld [vmem:[#allocation5 + $0x1a4] sm:$0xf]
    %v199 = vld [vmem:[#allocation5 + $0x1a8] sm:$0xf]
    %v200 = vld [vmem:[#allocation5 + $0x1ac] sm:$0xf]
    %v201 = vld [vmem:[#allocation5 + $0x1b0] sm:$0xf]
    %v202 = vld [vmem:[#allocation5 + $0x1b4] sm:$0xf]
    %v203 = vld [vmem:[#allocation5 + $0x1b8] sm:$0xf]
    %v204 = vld [vmem:[#allocation5 + $0x1bc] sm:$0xf]
    %v205 = vld [vmem:[#allocation5 + $0x1c0] sm:$0xf]
    %v206 = vld [vmem:[#allocation5 + $0x1c4] sm:$0xf]
    %v207 = vld [vmem:[#allocation5 + $0x1c8] sm:$0xf]
    %v208 = vld [vmem:[#allocation5 + $0x1cc] sm:$0xf]
    %v209 = vld [vmem:[#allocation5 + $0x1d0] sm:$0xf]
    %v210 = vld [vmem:[#allocation5 + $0x1d4] sm:$0xf]
    %v211 = vld [vmem:[#allocation5 + $0x1d8] sm:$0xf]
    %v212 = vld [vmem:[#allocation5 + $0x1dc] sm:$0xf]
    %v213 = vld [vmem:[#allocation5 + $0x1e0] sm:$0xf]
    %v214 = vld [vmem:[#allocation5 + $0x1e4] sm:$0xf]
    %v215 = vld [vmem:[#allocation5 + $0x1e8] sm:$0xf]
    %v216 = vld [vmem:[#allocation5 + $0x1ec] sm:$0xf]
    %v217 = vld [vmem:[#allocation5 + $0x1f0] sm:$0xf]
    %v218 = vld [vmem:[#allocation5 + $0x1f4] sm:$0xf]
    %v219 = vld [vmem:[#allocation5 + $0x1f8] sm:$0xf]
    %v220 = vld [vmem:[#allocation5 + $0x1fc] sm:$0xf]
    %v221 = vld [vmem:[#allocation5 + $0x200] sm:$0xf]
    %v222 = vld [vmem:[#allocation5 + $0x204] sm:$0xf]
    %v223 = vld [vmem:[#allocation5 + $0x208] sm:$0xf]
    %v224 = vld [vmem:[#allocation5 + $0x20c] sm:$0xf]
    %v225 = vld [vmem:[#allocation5 + $0x210] sm:$0xf]
    %v226 = vld [vmem:[#allocation5 + $0x214] sm:$0xf]
    %v227 = vld [vmem:[#allocation5 + $0x218] sm:$0xf]
    %v228 = vld [vmem:[#allocation5 + $0x21c] sm:$0xf]
    %v229 = vld [vmem:[#allocation5 + $0x220] sm:$0xf]
    %v230 = vld [vmem:[#allocation5 + $0x224] sm:$0xf]
    %v231 = vld [vmem:[#allocation5 + $0x228] sm:$0xf]
    %v232 = vld [vmem:[#allocation5 + $0x22c] sm:$0xf]
    %v233 = vld [vmem:[#allocation5 + $0x230] sm:$0xf]
    %v234 = vld [vmem:[#allocation5 + $0x234] sm:$0xf]
    %v235 = vld [vmem:[#allocation5 + $0x238] sm:$0xf]
    %v236 = vld [vmem:[#allocation5 + $0x23c] sm:$0xf]
    %v237 = vld [vmem:[#allocation5 + $0x240] sm:$0xf]
    %v238 = vld [vmem:[#allocation5 + $0x244] sm:$0xf]
    %v239 = vld [vmem:[#allocation5 + $0x248] sm:$0xf]
    %v240 = vld [vmem:[#allocation5 + $0x24c] sm:$0xf]
    %v241 = vld [vmem:[#allocation5 + $0x250] sm:$0xf]
    %v242 = vld [vmem:[#allocation5 + $0x254] sm:$0xf]
    %v243 = vld [vmem:[#allocation5 + $0x258] sm:$0xf]
    %v244 = vld [vmem:[#allocation5 + $0x25c] sm:$0xf]
    %v245 = vld [vmem:[#allocation5 + $0x260] sm:$0xf]
    %v246 = vld [vmem:[#allocation5 + $0x264] sm:$0xf]
    %v247 = vld [vmem:[#allocation5 + $0x268] sm:$0xf]
    %v248 = vld [vmem:[#allocation5 + $0x26c] sm:$0xf]
    %v249 = vld [vmem:[#allocation5 + $0x270] sm:$0xf]
    %v250 = vld [vmem:[#allocation5 + $0x274] sm:$0xf]
    %v251 = vld [vmem:[#allocation5 + $0x278] sm:$0xf]
    %v252 = vld [vmem:[#allocation5 + $0x27c] sm:$0xf]
    %v253 = vld [vmem:[#allocation5 + $0x280] sm:$0xf]
    %v254 = vld [vmem:[#allocation5 + $0x284] sm:$0xf]
    %v255 = vld [vmem:[#allocation5 + $0x288] sm:$0xf]
    %v256 = vld [vmem:[#allocation5 + $0x28c] sm:$0xf]
    %v257 = vld [vmem:[#allocation5 + $0x290] sm:$0xf]
    %v258 = vld [vmem:[#allocation5 + $0x294] sm:$0xf]
    %v259 = vld [vmem:[#allocation5 + $0x298] sm:$0xf]
    %v260 = vld [vmem:[#allocation5 + $0x29c] sm:$0xf]
    %v261 = vld [vmem:[#allocation5 + $0x2a0] sm:$0xf]
    %v262 = vld [vmem:[#allocation5 + $0x2a4] sm:$0xf]
    %v263 = vld [vmem:[#allocation5 + $0x2a8] sm:$0xf]
    %v264 = vld [vmem:[#allocation5 + $0x2ac] sm:$0xf]
    %v265 = vld [vmem:[#allocation5 + $0x2b0] sm:$0xf]
    %v266 = vld [vmem:[#allocation5 + $0x2b4] sm:$0xf]
    %v267 = vld [vmem:[#allocation5 + $0x2b8] sm:$0xf]
    %v268 = vld [vmem:[#allocation5 + $0x2bc] sm:$0xf]
    %v269 = vld [vmem:[#allocation5 + $0x2c0] sm:$0xf]
    %v270 = vld [vmem:[#allocation5 + $0x2c4] sm:$0xf]
    %v271 = vld [vmem:[#allocation5 + $0x2c8] sm:$0xf]
    %v272 = vld [vmem:[#allocation5 + $0x2cc] sm:$0xf]
    %v273 = vld [vmem:[#allocation5 + $0x2d0] sm:$0xf]
    %v274 = vld [vmem:[#allocation5 + $0x2d4] sm:$0xf]
    %v275 = vld [vmem:[#allocation5 + $0x2d8] sm:$0xf]
    %v276 = vld [vmem:[#allocation5 + $0x2dc] sm:$0xf]
    %v277 = vld [vmem:[#allocation5 + $0x2e0] sm:$0xf]
    %v278 = vld [vmem:[#allocation5 + $0x2e4] sm:$0xf]
    %v279 = vld [vmem:[#allocation5 + $0x2e8] sm:$0xf]
    %v280 = vld [vmem:[#allocation5 + $0x2ec] sm:$0xf]
    %v281 = vld [vmem:[#allocation5 + $0x2f0] sm:$0xf]
    %v282 = vld [vmem:[#allocation5 + $0x2f4] sm:$0xf]
    %v283 = vld [vmem:[#allocation5 + $0x2f8] sm:$0xf]
    %v284 = vld [vmem:[#allocation5 + $0x2fc] sm:$0xf]
    %v285 = vld [vmem:[#allocation5 + $0x300] sm:$0xf]
    %v286 = vld [vmem:[#allocation5 + $0x304] sm:$0xf]
    %v287 = vld [vmem:[#allocation5 + $0x308] sm:$0xf]
    %v288 = vld [vmem:[#allocation5 + $0x30c] sm:$0xf]
    %v289 = vld [vmem:[#allocation5 + $0x310] sm:$0xf]
    %v290 = vld [vmem:[#allocation5 + $0x314] sm:$0xf]
    %v291 = vld [vmem:[#allocation5 + $0x318] sm:$0xf]
    %v292 = vld [vmem:[#allocation5 + $0x31c] sm:$0xf]
    %v293 = vld [vmem:[#allocation5 + $0x320] sm:$0xf]
    %v294 = vld [vmem:[#allocation5 + $0x324] sm:$0xf]
    %v295 = vld [vmem:[#allocation5 + $0x328] sm:$0xf]
    %v296 = vld [vmem:[#allocation5 + $0x32c] sm:$0xf]
    %v297 = vld [vmem:[#allocation5 + $0x330] sm:$0xf]
    %v298 = vld [vmem:[#allocation5 + $0x334] sm:$0xf]
    %v299 = vld [vmem:[#allocation5 + $0x338] sm:$0xf]
    %v300 = vld [vmem:[#allocation5 + $0x33c] sm:$0xf]
    %v301 = vld [vmem:[#allocation5 + $0x340] sm:$0xf]
    %v302 = vld [vmem:[#allocation5 + $0x344] sm:$0xf]
    %v303 = vld [vmem:[#allocation5 + $0x348] sm:$0xf]
    %v304 = vld [vmem:[#allocation5 + $0x34c] sm:$0xf]
    %v305 = vld [vmem:[#allocation5 + $0x350] sm:$0xf]
    %v306 = vld [vmem:[#allocation5 + $0x354] sm:$0xf]
    %v307 = vld [vmem:[#allocation5 + $0x358] sm:$0xf]
    %v308 = vld [vmem:[#allocation5 + $0x35c] sm:$0xf]
    %v309 = vld [vmem:[#allocation5 + $0x360] sm:$0xf]
    %v310 = vld [vmem:[#allocation5 + $0x364] sm:$0xf]
    %v311 = vld [vmem:[#allocation5 + $0x368] sm:$0xf]
    %v312 = vld [vmem:[#allocation5 + $0x36c] sm:$0xf]
    %v313 = vld [vmem:[#allocation5 + $0x370] sm:$0xf]
    %v314 = vld [vmem:[#allocation5 + $0x374] sm:$0xf]
    %v315 = vld [vmem:[#allocation5 + $0x378] sm:$0xf]
    %v316 = vld [vmem:[#allocation5 + $0x37c] sm:$0xf]
    %v317 = vld [vmem:[#allocation5 + $0x380] sm:$0xf]
    %v318 = vld [vmem:[#allocation5 + $0x384] sm:$0xf]
    %v319 = vld [vmem:[#allocation5 + $0x388] sm:$0xf]
    %v320 = vld [vmem:[#allocation5 + $0x38c] sm:$0xf]
    %v321 = vld [vmem:[#allocation5 + $0x390] sm:$0xf]
    %v322 = vld [vmem:[#allocation5 + $0x394] sm:$0xf]
    %v323 = vld [vmem:[#allocation5 + $0x398] sm:$0xf]
    %v324 = vld [vmem:[#allocation5 + $0x39c] sm:$0xf]
    %v325 = vld [vmem:[#allocation5 + $0x3a0] sm:$0xf]
    %v326 = vld [vmem:[#allocation5 + $0x3a4] sm:$0xf]
    %v327 = vld [vmem:[#allocation5 + $0x3a8] sm:$0xf]
    %v328 = vld [vmem:[#allocation5 + $0x3ac] sm:$0xf]
    %v329 = vld [vmem:[#allocation5 + $0x3b0] sm:$0xf]
    %v330 = vld [vmem:[#allocation5 + $0x3b4] sm:$0xf]
    %v331 = vld [vmem:[#allocation5 + $0x3b8] sm:$0xf]
    %v332 = vld [vmem:[#allocation5 + $0x3bc] sm:$0xf]
    %v333 = vld [vmem:[#allocation5 + $0x3c0] sm:$0xf]
    %v334 = vld [vmem:[#allocation5 + $0x3c4] sm:$0xf]
    %v335 = vld [vmem:[#allocation5 + $0x3c8] sm:$0xf]
    %v336 = vld [vmem:[#allocation5 + $0x3cc] sm:$0xf]
    %v337 = vld [vmem:[#allocation5 + $0x3d0] sm:$0xf]
    %v338 = vld [vmem:[#allocation5 + $0x3d4] sm:$0xf]
    %v339 = vld [vmem:[#allocation5 + $0x3d8] sm:$0xf]
    %v340 = vld [vmem:[#allocation5 + $0x3dc] sm:$0xf]
    %v341 = vld [vmem:[#allocation5 + $0x3e0] sm:$0xf]
    %v342 = vld [vmem:[#allocation5 + $0x3e4] sm:$0xf]
    %v343 = vld [vmem:[#allocation5 + $0x3e8] sm:$0xf]
    %v344 = vld [vmem:[#allocation5 + $0x3ec] sm:$0xf]
    %v345 = vld [vmem:[#allocation5 + $0x3f0] sm:$0xf]
    %v346 = vld [vmem:[#allocation5 + $0x3f4] sm:$0xf]
    %v347 = vld [vmem:[#allocation5 + $0x3f8] sm:$0xf]
    %v348 = vld [vmem:[#allocation5 + $0x3fc] sm:$0xf]
    %v349 = vld [vmem:[#allocation5 + $0x400] sm:$0xf]
    %v350 = vld [vmem:[#allocation5 + $0x404] sm:$0xf]
    %v351 = vld [vmem:[#allocation5 + $0x408] sm:$0xf]
    %v352 = vld [vmem:[#allocation5 + $0x40c] sm:$0xf]
    %v353 = vld [vmem:[#allocation5 + $0x410] sm:$0xf]
    %v354 = vld [vmem:[#allocation5 + $0x414] sm:$0xf]
    %v355 = vld [vmem:[#allocation5 + $0x418] sm:$0xf]
    %v356 = vld [vmem:[#allocation5 + $0x41c] sm:$0xf]
    %v357 = vld [vmem:[#allocation5 + $0x420] sm:$0xf]
    %v358 = vld [vmem:[#allocation5 + $0x424] sm:$0xf]
    %v359 = vld [vmem:[#allocation5 + $0x428] sm:$0xf]
    %v360 = vld [vmem:[#allocation5 + $0x42c] sm:$0xf]
    %v361 = vld [vmem:[#allocation5 + $0x430] sm:$0xf]
    %v362 = vld [vmem:[#allocation5 + $0x434] sm:$0xf]
    %v363 = vld [vmem:[#allocation5 + $0x438] sm:$0xf]
    %v364 = vld [vmem:[#allocation5 + $0x43c] sm:$0xf]
    %v365 = vld [vmem:[#allocation5 + $0x440] sm:$0xf]
    %v366 = vld [vmem:[#allocation5 + $0x444] sm:$0xf]
    %v367 = vld [vmem:[#allocation5 + $0x448] sm:$0xf]
    %v368 = vld [vmem:[#allocation5 + $0x44c] sm:$0xf]
    %v369 = vld [vmem:[#allocation5 + $0x450] sm:$0xf]
    %v370 = vld [vmem:[#allocation5 + $0x454] sm:$0xf]
    %v371 = vld [vmem:[#allocation5 + $0x458] sm:$0xf]
    %v372 = vld [vmem:[#allocation5 + $0x45c] sm:$0xf]
    %v373 = vld [vmem:[#allocation5 + $0x460] sm:$0xf]
    %v374 = vld [vmem:[#allocation5 + $0x464] sm:$0xf]
    %v375 = vld [vmem:[#allocation5 + $0x468] sm:$0xf]
    %v376 = vld [vmem:[#allocation5 + $0x46c] sm:$0xf]
    %v377 = vld [vmem:[#allocation5 + $0x470] sm:$0xf]
    %v378 = vld [vmem:[#allocation5 + $0x474] sm:$0xf]
    %v379 = vld [vmem:[#allocation5 + $0x478] sm:$0xf]
    %v380 = vld [vmem:[#allocation5 + $0x47c] sm:$0xf]
    %v381 = vld [vmem:[#allocation5 + $0x480] sm:$0xf]
    %v382 = vld [vmem:[#allocation5 + $0x484] sm:$0xf]
    %v383 = vld [vmem:[#allocation5 + $0x488] sm:$0xf]
    %v384 = vld [vmem:[#allocation5 + $0x48c] sm:$0xf]
    %v385 = vld [vmem:[#allocation5 + $0x490] sm:$0xf]
    %v386 = vld [vmem:[#allocation5 + $0x494] sm:$0xf]
    %v387 = vld [vmem:[#allocation5 + $0x498] sm:$0xf]
    %v388 = vld [vmem:[#allocation5 + $0x49c] sm:$0xf]
    %v389 = vld [vmem:[#allocation5 + $0x4a0] sm:$0xf]
    %v390 = vld [vmem:[#allocation5 + $0x4a4] sm:$0xf]
    %v391 = vld [vmem:[#allocation5 + $0x4a8] sm:$0xf]
    %v392 = vld [vmem:[#allocation5 + $0x4ac] sm:$0xf]
    %v393 = vld [vmem:[#allocation5 + $0x4b0] sm:$0xf]
    %v394 = vld [vmem:[#allocation5 + $0x4b4] sm:$0xf]
    %v395 = vld [vmem:[#allocation5 + $0x4b8] sm:$0xf]
    %v396 = vld [vmem:[#allocation5 + $0x4bc] sm:$0xf]
    %v397 = vld [vmem:[#allocation5 + $0x4c0] sm:$0xf]
    %v398 = vld [vmem:[#allocation5 + $0x4c4] sm:$0xf]
    %v399 = vld [vmem:[#allocation5 + $0x4c8] sm:$0xf]
    %v400 = vld [vmem:[#allocation5 + $0x4cc] sm:$0xf]
    %v401 = vld [vmem:[#allocation5 + $0x4d0] sm:$0xf]
    %v402 = vld [vmem:[#allocation5 + $0x4d4] sm:$0xf]
    %v403 = vld [vmem:[#allocation5 + $0x4d8] sm:$0xf]
    %v404 = vld [vmem:[#allocation5 + $0x4dc] sm:$0xf]
    %v405 = vld [vmem:[#allocation5 + $0x4e0] sm:$0xf]
    %v406 = vld [vmem:[#allocation5 + $0x4e4] sm:$0xf]
    %v407 = vld [vmem:[#allocation5 + $0x4e8] sm:$0xf]
    %v408 = vld [vmem:[#allocation5 + $0x4ec] sm:$0xf]
    %v409 = vld [vmem:[#allocation5 + $0x4f0] sm:$0xf]
    %v410 = vld [vmem:[#allocation5 + $0x4f4] sm:$0xf]
    %v411 = vld [vmem:[#allocation5 + $0x4f8] sm:$0xf]
    %v412 = vld [vmem:[#allocation5 + $0x4fc] sm:$0xf]
    %v413 = vld [vmem:[#allocation5 + $0x500] sm:$0xf]
    %v414 = vld [vmem:[#allocation5 + $0x504] sm:$0xf]
    %v415 = vld [vmem:[#allocation5 + $0x508] sm:$0xf]
    %v416 = vld [vmem:[#allocation5 + $0x50c] sm:$0xf]
    %v417 = vld [vmem:[#allocation5 + $0x510] sm:$0xf]
    %v418 = vld [vmem:[#allocation5 + $0x514] sm:$0xf]
    %v419 = vld [vmem:[#allocation5 + $0x518] sm:$0xf]
    %v420 = vld [vmem:[#allocation5 + $0x51c] sm:$0xf]
    %v421 = vld [vmem:[#allocation5 + $0x520] sm:$0xf]
    %v422 = vld [vmem:[#allocation5 + $0x524] sm:$0xf]
    %v423 = vld [vmem:[#allocation5 + $0x528] sm:$0xf]
    %v424 = vld [vmem:[#allocation5 + $0x52c] sm:$0xf]
    %v425 = vld [vmem:[#allocation5 + $0x530] sm:$0xf]
    %v426 = vld [vmem:[#allocation5 + $0x534] sm:$0xf]
    %v427 = vld [vmem:[#allocation5 + $0x538] sm:$0xf]
    %v428 = vld [vmem:[#allocation5 + $0x53c] sm:$0xf]
    %v429 = vld [vmem:[#allocation5 + $0x540] sm:$0xf]
    %v430 = vld [vmem:[#allocation5 + $0x544] sm:$0xf]
    %v431 = vld [vmem:[#allocation5 + $0x548] sm:$0xf]
    %v432 = vld [vmem:[#allocation5 + $0x54c] sm:$0xf]
    %v433 = vld [vmem:[#allocation5 + $0x550] sm:$0xf]
    %v434 = vld [vmem:[#allocation5 + $0x554] sm:$0xf]
    %v435 = vld [vmem:[#allocation5 + $0x558] sm:$0xf]
    %v436 = vld [vmem:[#allocation5 + $0x55c] sm:$0xf]
    %v437 = vld [vmem:[#allocation5 + $0x560] sm:$0xf]
    %v438 = vld [vmem:[#allocation5 + $0x564] sm:$0xf]
    %v439 = vld [vmem:[#allocation5 + $0x568] sm:$0xf]
    %v440 = vld [vmem:[#allocation5 + $0x56c] sm:$0xf]
    %v441 = vld [vmem:[#allocation5 + $0x570] sm:$0xf]
    %v442 = vld [vmem:[#allocation5 + $0x574] sm:$0xf]
    %v443 = vld [vmem:[#allocation5 + $0x578] sm:$0xf]
    %v444 = vld [vmem:[#allocation5 + $0x57c] sm:$0xf]
    %v445 = vld [vmem:[#allocation5 + $0x580] sm:$0xf]
    %v446 = vld [vmem:[#allocation5 + $0x584] sm:$0xf]
    %v447 = vld [vmem:[#allocation5 + $0x588] sm:$0xf]
    %v448 = vld [vmem:[#allocation5 + $0x58c] sm:$0xf]
    %v449 = vld [vmem:[#allocation5 + $0x590] sm:$0xf]
    %v450 = vld [vmem:[#allocation5 + $0x594] sm:$0xf]
    %v451 = vld [vmem:[#allocation5 + $0x598] sm:$0xf]
    %v452 = vld [vmem:[#allocation5 + $0x59c] sm:$0xf]
    %v453 = vld [vmem:[#allocation5 + $0x5a0] sm:$0xf]
    %v454 = vld [vmem:[#allocation5 + $0x5a4] sm:$0xf]
    %v455 = vld [vmem:[#allocation5 + $0x5a8] sm:$0xf]
    %v456 = vld [vmem:[#allocation5 + $0x5ac] sm:$0xf]
    %v457 = vld [vmem:[#allocation5 + $0x5b0] sm:$0xf]
    %v458 = vld [vmem:[#allocation5 + $0x5b4] sm:$0xf]
    %v459 = vld [vmem:[#allocation5 + $0x5b8] sm:$0xf]
    %v460 = vld [vmem:[#allocation5 + $0x5bc] sm:$0xf]
    %v461 = vld [vmem:[#allocation5 + $0x5c0] sm:$0xf]
    %v462 = vld [vmem:[#allocation5 + $0x5c4] sm:$0xf]
    %v463 = vld [vmem:[#allocation5 + $0x5c8] sm:$0xf]
    %v464 = vld [vmem:[#allocation5 + $0x5cc] sm:$0xf]
    %v465 = vld [vmem:[#allocation5 + $0x5d0] sm:$0xf]
    %v466 = vld [vmem:[#allocation5 + $0x5d4] sm:$0xf]
    %v467 = vld [vmem:[#allocation5 + $0x5d8] sm:$0xf]
    %v468 = vld [vmem:[#allocation5 + $0x5dc] sm:$0xf]
    %v469 = vld [vmem:[#allocation5 + $0x5e0] sm:$0xf]
    %v470 = vld [vmem:[#allocation5 + $0x5e4] sm:$0xf]
    %v471 = vld [vmem:[#allocation5 + $0x5e8] sm:$0xf]
    %v472 = vld [vmem:[#allocation5 + $0x5ec] sm:$0xf]
    %v473 = vld [vmem:[#allocation5 + $0x5f0] sm:$0xf]
    %v474 = vld [vmem:[#allocation5 + $0x5f4] sm:$0xf]
    %v475 = vld [vmem:[#allocation5 + $0x5f8] sm:$0xf]
    %v476 = vld [vmem:[#allocation5 + $0x5fc] sm:$0xf]
    %v477 = vld [vmem:[%s2] sm:$0x1]
    %v479 = vlaneseq
    %v480 = vshrl.u32 %v479, 7
    %v481 = vsub.s32 0, %v480
    %v482 = vrot.slane %v477, %v481
    %v496 = vunpack.c.l.b16 %v81
    %v497 = vunpack.c.h.b16 %v81
    %v498 = vunpack.c.l.b16 %v82
    %v499 = vunpack.c.h.b16 %v82
    %v500 = vunpack.c.l.b16 %v83
    %v501 = vunpack.c.h.b16 %v83
    %v502 = vunpack.c.l.b16 %v84
    %v503 = vunpack.c.h.b16 %v84
    %v504 = vunpack.c.l.b16 %v85
    %v505 = vunpack.c.h.b16 %v85
    %v506 = vunpack.c.l.b16 %v86
    %v507 = vunpack.c.h.b16 %v86
    %v508 = vunpack.c.l.b16 %v87
    %v509 = vunpack.c.h.b16 %v87
    %v510 = vunpack.c.l.b16 %v88
    %v511 = vunpack.c.h.b16 %v88
    %v512 = vunpack.c.l.b16 %v89
    %v513 = vunpack.c.h.b16 %v89
    %v514 = vunpack.c.l.b16 %v90
    %v515 = vunpack.c.h.b16 %v90
    %v516 = vunpack.c.l.b16 %v91
    %v517 = vunpack.c.h.b16 %v91
    %v518 = vunpack.c.l.b16 %v92
    %v519 = vunpack.c.h.b16 %v92
    %v520 = vpack.c.b16 %v496, %v496
    %v521 = vpack.c.b16 %v497, %v497
    %v522 = vpack.c.b16 %v498, %v498
    %v523 = vpack.c.b16 %v499, %v499
    %v524 = vpack.c.b16 %v500, %v500
    %v525 = vpack.c.b16 %v501, %v501
    %v526 = vpack.c.b16 %v502, %v502
    %v527 = vpack.c.b16 %v503, %v503
    %v528 = vpack.c.b16 %v504, %v504
    %v529 = vpack.c.b16 %v505, %v505
    %v530 = vpack.c.b16 %v506, %v506
    %v531 = vpack.c.b16 %v507, %v507
    %v532 = vpack.c.b16 %v508, %v508
    %v533 = vpack.c.b16 %v509, %v509
    %v534 = vpack.c.b16 %v510, %v510
    %v535 = vpack.c.b16 %v511, %v511
    %v536 = vpack.c.b16 %v512, %v512
    %v537 = vpack.c.b16 %v513, %v513
    %v538 = vpack.c.b16 %v514, %v514
    %v539 = vpack.c.b16 %v515, %v515
    %v540 = vpack.c.b16 %v516, %v516
    %v541 = vpack.c.b16 %v517, %v517
    %v542 = vpack.c.b16 %v518, %v518
    %v543 = vpack.c.b16 %v519, %v519
    %v952 = vunpack.c.l.b16 %v93
    %v953 = vunpack.c.l.b16 %v94
    %v954 = vunpack.c.l.b16 %v95
    %v955 = vunpack.c.l.b16 %v96
    %v956 = vunpack.c.l.b16 %v97
    %v957 = vunpack.c.l.b16 %v98
    %v958 = vunpack.c.l.b16 %v99
    %v959 = vunpack.c.l.b16 %v100
    %v960 = vunpack.c.l.b16 %v101
    %v961 = vunpack.c.l.b16 %v102
    %v962 = vunpack.c.l.b16 %v103
    %v963 = vunpack.c.l.b16 %v104
    %v964 = vunpack.c.l.b16 %v105
    %v965 = vunpack.c.l.b16 %v106
    %v966 = vunpack.c.l.b16 %v107
    %v967 = vunpack.c.l.b16 %v108
    %v968 = vunpack.c.l.b16 %v109
    %v969 = vunpack.c.l.b16 %v110
    %v970 = vunpack.c.l.b16 %v111
    %v971 = vunpack.c.l.b16 %v112
    %v972 = vunpack.c.l.b16 %v113
    %v973 = vunpack.c.l.b16 %v114
    %v974 = vunpack.c.l.b16 %v115
    %v975 = vunpack.c.l.b16 %v116
    %v976 = vunpack.c.l.b16 %v117
    %v977 = vunpack.c.l.b16 %v118
    %v978 = vunpack.c.l.b16 %v119
    %v979 = vunpack.c.l.b16 %v120
    %v980 = vunpack.c.l.b16 %v121
    %v981 = vunpack.c.l.b16 %v122
    %v982 = vunpack.c.l.b16 %v123
    %v983 = vunpack.c.l.b16 %v124
    %v984 = vunpack.c.l.b16 %v125
    %v985 = vunpack.c.l.b16 %v126
    %v986 = vunpack.c.l.b16 %v127
    %v987 = vunpack.c.l.b16 %v128
    %v988 = vunpack.c.l.b16 %v129
    %v989 = vunpack.c.l.b16 %v130
    %v990 = vunpack.c.l.b16 %v131
    %v991 = vunpack.c.l.b16 %v132
    %v992 = vunpack.c.l.b16 %v133
    %v993 = vunpack.c.l.b16 %v134
    %v994 = vunpack.c.l.b16 %v135
    %v995 = vunpack.c.l.b16 %v136
    %v996 = vunpack.c.l.b16 %v137
    %v997 = vunpack.c.l.b16 %v138
    %v998 = vunpack.c.l.b16 %v139
    %v999 = vunpack.c.l.b16 %v140
    %v1000 = vunpack.c.l.b16 %v141
    %v1001 = vunpack.c.l.b16 %v142
    %v1002 = vunpack.c.l.b16 %v143
    %v1003 = vunpack.c.l.b16 %v144
    %v1004 = vunpack.c.l.b16 %v145
    %v1005 = vunpack.c.l.b16 %v146
    %v1006 = vunpack.c.l.b16 %v147
    %v1007 = vunpack.c.l.b16 %v148
    %v1008 = vunpack.c.l.b16 %v149
    %v1009 = vunpack.c.l.b16 %v150
    %v1010 = vunpack.c.l.b16 %v151
    %v1011 = vunpack.c.l.b16 %v152
    %v1012 = vunpack.c.l.b16 %v153
    %v1013 = vunpack.c.l.b16 %v154
    %v1014 = vunpack.c.l.b16 %v155
    %v1015 = vunpack.c.l.b16 %v156
    %v1016 = vunpack.c.l.b16 %v157
    %v1017 = vunpack.c.l.b16 %v158
    %v1018 = vunpack.c.l.b16 %v159
    %v1019 = vunpack.c.l.b16 %v160
    %v1020 = vunpack.c.l.b16 %v161
    %v1021 = vunpack.c.l.b16 %v162
    %v1022 = vunpack.c.l.b16 %v163
    %v1023 = vunpack.c.l.b16 %v164
    %v1024 = vunpack.c.l.b16 %v165
    %v1025 = vunpack.c.l.b16 %v166
    %v1026 = vunpack.c.l.b16 %v167
    %v1027 = vunpack.c.l.b16 %v168
    %v1028 = vunpack.c.l.b16 %v169
    %v1029 = vunpack.c.l.b16 %v170
    %v1030 = vunpack.c.l.b16 %v171
    %v1031 = vunpack.c.l.b16 %v172
    %v1032 = vunpack.c.l.b16 %v173
    %v1033 = vunpack.c.l.b16 %v174
    %v1034 = vunpack.c.l.b16 %v175
    %v1035 = vunpack.c.l.b16 %v176
    %v1036 = vunpack.c.l.b16 %v177
    %v1037 = vunpack.c.l.b16 %v178
    %v1038 = vunpack.c.l.b16 %v179
    %v1039 = vunpack.c.l.b16 %v180
    %v1040 = vunpack.c.l.b16 %v181
    %v1041 = vunpack.c.l.b16 %v182
    %v1042 = vunpack.c.l.b16 %v183
    %v1043 = vunpack.c.l.b16 %v184
    %v1044 = vunpack.c.l.b16 %v185
    %v1045 = vunpack.c.l.b16 %v186
    %v1046 = vunpack.c.l.b16 %v187
    %v1047 = vunpack.c.l.b16 %v188
    %v1048 = vunpack.c.l.b16 %v189
    %v1049 = vunpack.c.l.b16 %v190
    %v1050 = vunpack.c.l.b16 %v191
    %v1051 = vunpack.c.l.b16 %v192
    %v1052 = vunpack.c.l.b16 %v193
    %v1053 = vunpack.c.l.b16 %v194
    %v1054 = vunpack.c.l.b16 %v195
    %v1055 = vunpack.c.l.b16 %v196
    %v1056 = vunpack.c.l.b16 %v197
    %v1057 = vunpack.c.l.b16 %v198
    %v1058 = vunpack.c.l.b16 %v199
    %v1059 = vunpack.c.l.b16 %v200
    %v1060 = vunpack.c.l.b16 %v201
    %v1061 = vunpack.c.l.b16 %v202
    %v1062 = vunpack.c.l.b16 %v203
    %v1063 = vunpack.c.l.b16 %v204
    %v1064 = vunpack.c.l.b16 %v205
    %v1065 = vunpack.c.l.b16 %v206
    %v1066 = vunpack.c.l.b16 %v207
    %v1067 = vunpack.c.l.b16 %v208
    %v1068 = vunpack.c.l.b16 %v209
    %v1069 = vunpack.c.l.b16 %v210
    %v1070 = vunpack.c.l.b16 %v211
    %v1071 = vunpack.c.l.b16 %v212
    %v1072 = vunpack.c.l.b16 %v213
    %v1073 = vunpack.c.l.b16 %v214
    %v1074 = vunpack.c.l.b16 %v215
    %v1075 = vunpack.c.l.b16 %v216
    %v1076 = vunpack.c.l.b16 %v217
    %v1077 = vunpack.c.l.b16 %v218
    %v1078 = vunpack.c.l.b16 %v219
    %v1079 = vunpack.c.l.b16 %v220
    %v1080 = vunpack.c.l.b16 %v221
    %v1081 = vunpack.c.l.b16 %v222
    %v1082 = vunpack.c.l.b16 %v223
    %v1083 = vunpack.c.l.b16 %v224
    %v1084 = vunpack.c.l.b16 %v225
    %v1085 = vunpack.c.l.b16 %v226
    %v1086 = vunpack.c.l.b16 %v227
    %v1087 = vunpack.c.l.b16 %v228
    %v1088 = vunpack.c.l.b16 %v229
    %v1089 = vunpack.c.l.b16 %v230
    %v1090 = vunpack.c.l.b16 %v231
    %v1091 = vunpack.c.l.b16 %v232
    %v1092 = vunpack.c.l.b16 %v233
    %v1093 = vunpack.c.l.b16 %v234
    %v1094 = vunpack.c.l.b16 %v235
    %v1095 = vunpack.c.l.b16 %v236
    %v1096 = vunpack.c.l.b16 %v237
    %v1097 = vunpack.c.l.b16 %v238
    %v1098 = vunpack.c.l.b16 %v239
    %v1099 = vunpack.c.l.b16 %v240
    %v1100 = vunpack.c.l.b16 %v241
    %v1101 = vunpack.c.l.b16 %v242
    %v1102 = vunpack.c.l.b16 %v243
    %v1103 = vunpack.c.l.b16 %v244
    %v1104 = vunpack.c.l.b16 %v245
    %v1105 = vunpack.c.l.b16 %v246
    %v1106 = vunpack.c.l.b16 %v247
    %v1107 = vunpack.c.l.b16 %v248
    %v1108 = vunpack.c.l.b16 %v249
    %v1109 = vunpack.c.l.b16 %v250
    %v1110 = vunpack.c.l.b16 %v251
    %v1111 = vunpack.c.l.b16 %v252
    %v1112 = vunpack.c.l.b16 %v253
    %v1113 = vunpack.c.l.b16 %v254
    %v1114 = vunpack.c.l.b16 %v255
    %v1115 = vunpack.c.l.b16 %v256
    %v1116 = vunpack.c.l.b16 %v257
    %v1117 = vunpack.c.l.b16 %v258
    %v1118 = vunpack.c.l.b16 %v259
    %v1119 = vunpack.c.l.b16 %v260
    %v1120 = vunpack.c.l.b16 %v261
    %v1121 = vunpack.c.l.b16 %v262
    %v1122 = vunpack.c.l.b16 %v263
    %v1123 = vunpack.c.l.b16 %v264
    %v1124 = vunpack.c.l.b16 %v265
    %v1125 = vunpack.c.l.b16 %v266
    %v1126 = vunpack.c.l.b16 %v267
    %v1127 = vunpack.c.l.b16 %v268
    %v1128 = vunpack.c.l.b16 %v269
    %v1129 = vunpack.c.l.b16 %v270
    %v1130 = vunpack.c.l.b16 %v271
    %v1131 = vunpack.c.l.b16 %v272
    %v1132 = vunpack.c.l.b16 %v273
    %v1133 = vunpack.c.l.b16 %v274
    %v1134 = vunpack.c.l.b16 %v275
    %v1135 = vunpack.c.l.b16 %v276
    %v1136 = vunpack.c.l.b16 %v277
    %v1137 = vunpack.c.l.b16 %v278
    %v1138 = vunpack.c.l.b16 %v279
    %v1139 = vunpack.c.l.b16 %v280
    %v1140 = vunpack.c.l.b16 %v281
    %v1141 = vunpack.c.l.b16 %v282
    %v1142 = vunpack.c.l.b16 %v283
    %v1143 = vunpack.c.l.b16 %v284
    %v1144 = vunpack.c.l.b16 %v285
    %v1145 = vunpack.c.l.b16 %v286
    %v1146 = vunpack.c.l.b16 %v287
    %v1147 = vunpack.c.l.b16 %v288
    %v1148 = vunpack.c.l.b16 %v289
    %v1149 = vunpack.c.l.b16 %v290
    %v1150 = vunpack.c.l.b16 %v291
    %v1151 = vunpack.c.l.b16 %v292
    %v1152 = vunpack.c.l.b16 %v293
    %v1153 = vunpack.c.l.b16 %v294
    %v1154 = vunpack.c.l.b16 %v295
    %v1155 = vunpack.c.l.b16 %v296
    %v1156 = vunpack.c.l.b16 %v297
    %v1157 = vunpack.c.l.b16 %v298
    %v1158 = vunpack.c.l.b16 %v299
    %v1159 = vunpack.c.l.b16 %v300
    %v1160 = vunpack.c.l.b16 %v301
    %v1161 = vunpack.c.l.b16 %v302
    %v1162 = vunpack.c.l.b16 %v303
    %v1163 = vunpack.c.l.b16 %v304
    %v1164 = vunpack.c.l.b16 %v305
    %v1165 = vunpack.c.l.b16 %v306
    %v1166 = vunpack.c.l.b16 %v307
    %v1167 = vunpack.c.l.b16 %v308
    %v1168 = vunpack.c.l.b16 %v309
    %v1169 = vunpack.c.l.b16 %v310
    %v1170 = vunpack.c.l.b16 %v311
    %v1171 = vunpack.c.l.b16 %v312
    %v1172 = vunpack.c.l.b16 %v313
    %v1173 = vunpack.c.l.b16 %v314
    %v1174 = vunpack.c.l.b16 %v315
    %v1175 = vunpack.c.l.b16 %v316
    %v1176 = vunpack.c.l.b16 %v317
    %v1177 = vunpack.c.l.b16 %v318
    %v1178 = vunpack.c.l.b16 %v319
    %v1179 = vunpack.c.l.b16 %v320
    %v1180 = vunpack.c.l.b16 %v321
    %v1181 = vunpack.c.l.b16 %v322
    %v1182 = vunpack.c.l.b16 %v323
    %v1183 = vunpack.c.l.b16 %v324
    %v1184 = vunpack.c.l.b16 %v325
    %v1185 = vunpack.c.l.b16 %v326
    %v1186 = vunpack.c.l.b16 %v327
    %v1187 = vunpack.c.l.b16 %v328
    %v1188 = vunpack.c.l.b16 %v329
    %v1189 = vunpack.c.l.b16 %v330
    %v1190 = vunpack.c.l.b16 %v331
    %v1191 = vunpack.c.l.b16 %v332
    %v1192 = vunpack.c.l.b16 %v333
    %v1193 = vunpack.c.l.b16 %v334
    %v1194 = vunpack.c.l.b16 %v335
    %v1195 = vunpack.c.l.b16 %v336
    %v1196 = vunpack.c.l.b16 %v337
    %v1197 = vunpack.c.l.b16 %v338
    %v1198 = vunpack.c.l.b16 %v339
    %v1199 = vunpack.c.l.b16 %v340
    %v1200 = vunpack.c.l.b16 %v341
    %v1201 = vunpack.c.l.b16 %v342
    %v1202 = vunpack.c.l.b16 %v343
    %v1203 = vunpack.c.l.b16 %v344
    %v1204 = vunpack.c.l.b16 %v345
    %v1205 = vunpack.c.l.b16 %v346
    %v1206 = vunpack.c.l.b16 %v347
    %v1207 = vunpack.c.l.b16 %v348
    %v1208 = vunpack.c.l.b16 %v349
    %v1209 = vunpack.c.l.b16 %v350
    %v1210 = vunpack.c.l.b16 %v351
    %v1211 = vunpack.c.l.b16 %v352
    %v1212 = vunpack.c.l.b16 %v353
    %v1213 = vunpack.c.l.b16 %v354
    %v1214 = vunpack.c.l.b16 %v355
    %v1215 = vunpack.c.l.b16 %v356
    %v1216 = vunpack.c.l.b16 %v357
    %v1217 = vunpack.c.l.b16 %v358
    %v1218 = vunpack.c.l.b16 %v359
    %v1219 = vunpack.c.l.b16 %v360
    %v1220 = vunpack.c.l.b16 %v361
    %v1221 = vunpack.c.l.b16 %v362
    %v1222 = vunpack.c.l.b16 %v363
    %v1223 = vunpack.c.l.b16 %v364
    %v1224 = vunpack.c.l.b16 %v365
    %v1225 = vunpack.c.l.b16 %v366
    %v1226 = vunpack.c.l.b16 %v367
    %v1227 = vunpack.c.l.b16 %v368
    %v1228 = vunpack.c.l.b16 %v369
    %v1229 = vunpack.c.l.b16 %v370
    %v1230 = vunpack.c.l.b16 %v371
    %v1231 = vunpack.c.l.b16 %v372
    %v1232 = vunpack.c.l.b16 %v373
    %v1233 = vunpack.c.l.b16 %v374
    %v1234 = vunpack.c.l.b16 %v375
    %v1235 = vunpack.c.l.b16 %v376
    %v1236 = vunpack.c.l.b16 %v377
    %v1237 = vunpack.c.l.b16 %v378
    %v1238 = vunpack.c.l.b16 %v379
    %v1239 = vunpack.c.l.b16 %v380
    %v1240 = vunpack.c.l.b16 %v381
    %v1241 = vunpack.c.l.b16 %v382
    %v1242 = vunpack.c.l.b16 %v383
    %v1243 = vunpack.c.l.b16 %v384
    %v1244 = vunpack.c.l.b16 %v385
    %v1245 = vunpack.c.l.b16 %v386
    %v1246 = vunpack.c.l.b16 %v387
    %v1247 = vunpack.c.l.b16 %v388
    %v1248 = vunpack.c.l.b16 %v389
    %v1249 = vunpack.c.l.b16 %v390
    %v1250 = vunpack.c.l.b16 %v391
    %v1251 = vunpack.c.l.b16 %v392
    %v1252 = vunpack.c.l.b16 %v393
    %v1253 = vunpack.c.l.b16 %v394
    %v1254 = vunpack.c.l.b16 %v395
    %v1255 = vunpack.c.l.b16 %v396
    %v1256 = vunpack.c.l.b16 %v397
    %v1257 = vunpack.c.l.b16 %v398
    %v1258 = vunpack.c.l.b16 %v399
    %v1259 = vunpack.c.l.b16 %v400
    %v1260 = vunpack.c.l.b16 %v401
    %v1261 = vunpack.c.l.b16 %v402
    %v1262 = vunpack.c.l.b16 %v403
    %v1263 = vunpack.c.l.b16 %v404
    %v1264 = vunpack.c.l.b16 %v405
    %v1265 = vunpack.c.l.b16 %v406
    %v1266 = vunpack.c.l.b16 %v407
    %v1267 = vunpack.c.l.b16 %v408
    %v1268 = vunpack.c.l.b16 %v409
    %v1269 = vunpack.c.l.b16 %v410
    %v1270 = vunpack.c.l.b16 %v411
    %v1271 = vunpack.c.l.b16 %v412
    %v1272 = vunpack.c.l.b16 %v413
    %v1273 = vunpack.c.l.b16 %v414
    %v1274 = vunpack.c.l.b16 %v415
    %v1275 = vunpack.c.l.b16 %v416
    %v1276 = vunpack.c.l.b16 %v417
    %v1277 = vunpack.c.l.b16 %v418
    %v1278 = vunpack.c.l.b16 %v419
    %v1279 = vunpack.c.l.b16 %v420
    %v1280 = vunpack.c.l.b16 %v421
    %v1281 = vunpack.c.l.b16 %v422
    %v1282 = vunpack.c.l.b16 %v423
    %v1283 = vunpack.c.l.b16 %v424
    %v1284 = vunpack.c.l.b16 %v425
    %v1285 = vunpack.c.l.b16 %v426
    %v1286 = vunpack.c.l.b16 %v427
    %v1287 = vunpack.c.l.b16 %v428
    %v1288 = vunpack.c.l.b16 %v429
    %v1289 = vunpack.c.l.b16 %v430
    %v1290 = vunpack.c.l.b16 %v431
    %v1291 = vunpack.c.l.b16 %v432
    %v1292 = vunpack.c.l.b16 %v433
    %v1293 = vunpack.c.l.b16 %v434
    %v1294 = vunpack.c.l.b16 %v435
    %v1295 = vunpack.c.l.b16 %v436
    %v1296 = vunpack.c.l.b16 %v437
    %v1297 = vunpack.c.l.b16 %v438
    %v1298 = vunpack.c.l.b16 %v439
    %v1299 = vunpack.c.l.b16 %v440
    %v1300 = vunpack.c.l.b16 %v441
    %v1301 = vunpack.c.l.b16 %v442
    %v1302 = vunpack.c.l.b16 %v443
    %v1303 = vunpack.c.l.b16 %v444
    %v1304 = vunpack.c.l.b16 %v445
    %v1305 = vunpack.c.l.b16 %v446
    %v1306 = vunpack.c.l.b16 %v447
    %v1307 = vunpack.c.l.b16 %v448
    %v1308 = vunpack.c.l.b16 %v449
    %v1309 = vunpack.c.l.b16 %v450
    %v1310 = vunpack.c.l.b16 %v451
    %v1311 = vunpack.c.l.b16 %v452
    %v1312 = vunpack.c.l.b16 %v453
    %v1313 = vunpack.c.l.b16 %v454
    %v1314 = vunpack.c.l.b16 %v455
    %v1315 = vunpack.c.l.b16 %v456
    %v1316 = vunpack.c.l.b16 %v457
    %v1317 = vunpack.c.l.b16 %v458
    %v1318 = vunpack.c.l.b16 %v459
    %v1319 = vunpack.c.l.b16 %v460
    %v1320 = vunpack.c.l.b16 %v461
    %v1321 = vunpack.c.l.b16 %v462
    %v1322 = vunpack.c.l.b16 %v463
    %v1323 = vunpack.c.l.b16 %v464
    %v1324 = vunpack.c.l.b16 %v465
    %v1325 = vunpack.c.l.b16 %v466
    %v1326 = vunpack.c.l.b16 %v467
    %v1327 = vunpack.c.l.b16 %v468
    %v1328 = vunpack.c.l.b16 %v469
    %v1329 = vunpack.c.l.b16 %v470
    %v1330 = vunpack.c.l.b16 %v471
    %v1331 = vunpack.c.l.b16 %v472
    %v1332 = vunpack.c.l.b16 %v473
    %v1333 = vunpack.c.l.b16 %v474
    %v1334 = vunpack.c.l.b16 %v475
    %v1335 = vunpack.c.l.b16 %v476
    %v1336 = vpack.c.b16 %v953, %v952
    %v1337 = vpack.c.b16 %v955, %v954
    %v1338 = vpack.c.b16 %v957, %v956
    %v1339 = vpack.c.b16 %v959, %v958
    %v1340 = vpack.c.b16 %v961, %v960
    %v1341 = vpack.c.b16 %v963, %v962
    %v1342 = vpack.c.b16 %v965, %v964
    %v1343 = vpack.c.b16 %v967, %v966
    %v1344 = vpack.c.b16 %v969, %v968
    %v1345 = vpack.c.b16 %v971, %v970
    %v1346 = vpack.c.b16 %v973, %v972
    %v1347 = vpack.c.b16 %v975, %v974
    %v1348 = vpack.c.b16 %v977, %v976
    %v1349 = vpack.c.b16 %v979, %v978
    %v1350 = vpack.c.b16 %v981, %v980
    %v1351 = vpack.c.b16 %v983, %v982
    %v1352 = vpack.c.b16 %v985, %v984
    %v1353 = vpack.c.b16 %v987, %v986
    %v1354 = vpack.c.b16 %v989, %v988
    %v1355 = vpack.c.b16 %v991, %v990
    %v1356 = vpack.c.b16 %v993, %v992
    %v1357 = vpack.c.b16 %v995, %v994
    %v1358 = vpack.c.b16 %v997, %v996
    %v1359 = vpack.c.b16 %v999, %v998
    %v1360 = vpack.c.b16 %v1001, %v1000
    %v1361 = vpack.c.b16 %v1003, %v1002
    %v1362 = vpack.c.b16 %v1005, %v1004
    %v1363 = vpack.c.b16 %v1007, %v1006
    %v1364 = vpack.c.b16 %v1009, %v1008
    %v1365 = vpack.c.b16 %v1011, %v1010
    %v1366 = vpack.c.b16 %v1013, %v1012
    %v1367 = vpack.c.b16 %v1015, %v1014
    %v1368 = vpack.c.b16 %v1017, %v1016
    %v1369 = vpack.c.b16 %v1019, %v1018
    %v1370 = vpack.c.b16 %v1021, %v1020
    %v1371 = vpack.c.b16 %v1023, %v1022
    %v1372 = vpack.c.b16 %v1025, %v1024
    %v1373 = vpack.c.b16 %v1027, %v1026
    %v1374 = vpack.c.b16 %v1029, %v1028
    %v1375 = vpack.c.b16 %v1031, %v1030
    %v1376 = vpack.c.b16 %v1033, %v1032
    %v1377 = vpack.c.b16 %v1035, %v1034
    %v1378 = vpack.c.b16 %v1037, %v1036
    %v1379 = vpack.c.b16 %v1039, %v1038
    %v1380 = vpack.c.b16 %v1041, %v1040
    %v1381 = vpack.c.b16 %v1043, %v1042
    %v1382 = vpack.c.b16 %v1045, %v1044
    %v1383 = vpack.c.b16 %v1047, %v1046
    %v1384 = vpack.c.b16 %v1049, %v1048
    %v1385 = vpack.c.b16 %v1051, %v1050
    %v1386 = vpack.c.b16 %v1053, %v1052
    %v1387 = vpack.c.b16 %v1055, %v1054
    %v1388 = vpack.c.b16 %v1057, %v1056
    %v1389 = vpack.c.b16 %v1059, %v1058
    %v1390 = vpack.c.b16 %v1061, %v1060
    %v1391 = vpack.c.b16 %v1063, %v1062
    %v1392 = vpack.c.b16 %v1065, %v1064
    %v1393 = vpack.c.b16 %v1067, %v1066
    %v1394 = vpack.c.b16 %v1069, %v1068
    %v1395 = vpack.c.b16 %v1071, %v1070
    %v1396 = vpack.c.b16 %v1073, %v1072
    %v1397 = vpack.c.b16 %v1075, %v1074
    %v1398 = vpack.c.b16 %v1077, %v1076
    %v1399 = vpack.c.b16 %v1079, %v1078
    %v1400 = vpack.c.b16 %v1081, %v1080
    %v1401 = vpack.c.b16 %v1083, %v1082
    %v1402 = vpack.c.b16 %v1085, %v1084
    %v1403 = vpack.c.b16 %v1087, %v1086
    %v1404 = vpack.c.b16 %v1089, %v1088
    %v1405 = vpack.c.b16 %v1091, %v1090
    %v1406 = vpack.c.b16 %v1093, %v1092
    %v1407 = vpack.c.b16 %v1095, %v1094
    %v1408 = vpack.c.b16 %v1097, %v1096
    %v1409 = vpack.c.b16 %v1099, %v1098
    %v1410 = vpack.c.b16 %v1101, %v1100
    %v1411 = vpack.c.b16 %v1103, %v1102
    %v1412 = vpack.c.b16 %v1105, %v1104
    %v1413 = vpack.c.b16 %v1107, %v1106
    %v1414 = vpack.c.b16 %v1109, %v1108
    %v1415 = vpack.c.b16 %v1111, %v1110
    %v1416 = vpack.c.b16 %v1113, %v1112
    %v1417 = vpack.c.b16 %v1115, %v1114
    %v1418 = vpack.c.b16 %v1117, %v1116
    %v1419 = vpack.c.b16 %v1119, %v1118
    %v1420 = vpack.c.b16 %v1121, %v1120
    %v1421 = vpack.c.b16 %v1123, %v1122
    %v1422 = vpack.c.b16 %v1125, %v1124
    %v1423 = vpack.c.b16 %v1127, %v1126
    %v1424 = vpack.c.b16 %v1129, %v1128
    %v1425 = vpack.c.b16 %v1131, %v1130
    %v1426 = vpack.c.b16 %v1133, %v1132
    %v1427 = vpack.c.b16 %v1135, %v1134
    %v1428 = vpack.c.b16 %v1137, %v1136
    %v1429 = vpack.c.b16 %v1139, %v1138
    %v1430 = vpack.c.b16 %v1141, %v1140
    %v1431 = vpack.c.b16 %v1143, %v1142
    %v1432 = vpack.c.b16 %v1145, %v1144
    %v1433 = vpack.c.b16 %v1147, %v1146
    %v1434 = vpack.c.b16 %v1149, %v1148
    %v1435 = vpack.c.b16 %v1151, %v1150
    %v1436 = vpack.c.b16 %v1153, %v1152
    %v1437 = vpack.c.b16 %v1155, %v1154
    %v1438 = vpack.c.b16 %v1157, %v1156
    %v1439 = vpack.c.b16 %v1159, %v1158
    %v1440 = vpack.c.b16 %v1161, %v1160
    %v1441 = vpack.c.b16 %v1163, %v1162
    %v1442 = vpack.c.b16 %v1165, %v1164
    %v1443 = vpack.c.b16 %v1167, %v1166
    %v1444 = vpack.c.b16 %v1169, %v1168
    %v1445 = vpack.c.b16 %v1171, %v1170
    %v1446 = vpack.c.b16 %v1173, %v1172
    %v1447 = vpack.c.b16 %v1175, %v1174
    %v1448 = vpack.c.b16 %v1177, %v1176
    %v1449 = vpack.c.b16 %v1179, %v1178
    %v1450 = vpack.c.b16 %v1181, %v1180
    %v1451 = vpack.c.b16 %v1183, %v1182
    %v1452 = vpack.c.b16 %v1185, %v1184
    %v1453 = vpack.c.b16 %v1187, %v1186
    %v1454 = vpack.c.b16 %v1189, %v1188
    %v1455 = vpack.c.b16 %v1191, %v1190
    %v1456 = vpack.c.b16 %v1193, %v1192
    %v1457 = vpack.c.b16 %v1195, %v1194
    %v1458 = vpack.c.b16 %v1197, %v1196
    %v1459 = vpack.c.b16 %v1199, %v1198
    %v1460 = vpack.c.b16 %v1201, %v1200
    %v1461 = vpack.c.b16 %v1203, %v1202
    %v1462 = vpack.c.b16 %v1205, %v1204
    %v1463 = vpack.c.b16 %v1207, %v1206
    %v1464 = vpack.c.b16 %v1209, %v1208
    %v1465 = vpack.c.b16 %v1211, %v1210
    %v1466 = vpack.c.b16 %v1213, %v1212
    %v1467 = vpack.c.b16 %v1215, %v1214
    %v1468 = vpack.c.b16 %v1217, %v1216
    %v1469 = vpack.c.b16 %v1219, %v1218
    %v1470 = vpack.c.b16 %v1221, %v1220
    %v1471 = vpack.c.b16 %v1223, %v1222
    %v1472 = vpack.c.b16 %v1225, %v1224
    %v1473 = vpack.c.b16 %v1227, %v1226
    %v1474 = vpack.c.b16 %v1229, %v1228
    %v1475 = vpack.c.b16 %v1231, %v1230
    %v1476 = vpack.c.b16 %v1233, %v1232
    %v1477 = vpack.c.b16 %v1235, %v1234
    %v1478 = vpack.c.b16 %v1237, %v1236
    %v1479 = vpack.c.b16 %v1239, %v1238
    %v1480 = vpack.c.b16 %v1241, %v1240
    %v1481 = vpack.c.b16 %v1243, %v1242
    %v1482 = vpack.c.b16 %v1245, %v1244
    %v1483 = vpack.c.b16 %v1247, %v1246
    %v1484 = vpack.c.b16 %v1249, %v1248
    %v1485 = vpack.c.b16 %v1251, %v1250
    %v1486 = vpack.c.b16 %v1253, %v1252
    %v1487 = vpack.c.b16 %v1255, %v1254
    %v1488 = vpack.c.b16 %v1257, %v1256
    %v1489 = vpack.c.b16 %v1259, %v1258
    %v1490 = vpack.c.b16 %v1261, %v1260
    %v1491 = vpack.c.b16 %v1263, %v1262
    %v1492 = vpack.c.b16 %v1265, %v1264
    %v1493 = vpack.c.b16 %v1267, %v1266
    %v1494 = vpack.c.b16 %v1269, %v1268
    %v1495 = vpack.c.b16 %v1271, %v1270
    %v1496 = vpack.c.b16 %v1273, %v1272
    %v1497 = vpack.c.b16 %v1275, %v1274
    %v1498 = vpack.c.b16 %v1277, %v1276
    %v1499 = vpack.c.b16 %v1279, %v1278
    %v1500 = vpack.c.b16 %v1281, %v1280
    %v1501 = vpack.c.b16 %v1283, %v1282
    %v1502 = vpack.c.b16 %v1285, %v1284
    %v1503 = vpack.c.b16 %v1287, %v1286
    %v1504 = vpack.c.b16 %v1289, %v1288
    %v1505 = vpack.c.b16 %v1291, %v1290
    %v1506 = vpack.c.b16 %v1293, %v1292
    %v1507 = vpack.c.b16 %v1295, %v1294
    %v1508 = vpack.c.b16 %v1297, %v1296
    %v1509 = vpack.c.b16 %v1299, %v1298
    %v1510 = vpack.c.b16 %v1301, %v1300
    %v1511 = vpack.c.b16 %v1303, %v1302
    %v1512 = vpack.c.b16 %v1305, %v1304
    %v1513 = vpack.c.b16 %v1307, %v1306
    %v1514 = vpack.c.b16 %v1309, %v1308
    %v1515 = vpack.c.b16 %v1311, %v1310
    %v1516 = vpack.c.b16 %v1313, %v1312
    %v1517 = vpack.c.b16 %v1315, %v1314
    %v1518 = vpack.c.b16 %v1317, %v1316
    %v1519 = vpack.c.b16 %v1319, %v1318
    %v1520 = vpack.c.b16 %v1321, %v1320
    %v1521 = vpack.c.b16 %v1323, %v1322
    %v1522 = vpack.c.b16 %v1325, %v1324
    %v1523 = vpack.c.b16 %v1327, %v1326
    %v1524 = vpack.c.b16 %v1329, %v1328
    %v1525 = vpack.c.b16 %v1331, %v1330
    %v1526 = vpack.c.b16 %v1333, %v1332
    %v1527 = vpack.c.b16 %v1335, %v1334
    %1720 = vmatprep.subr.bf16.mxu0 0
    %1721 = vmatpush1.bf16.msra.mxu0 %v1336
    %1722 = vmatprep.subr.bf16.mxu0 0
    %1723 = vmatpush1.bf16.msra.mxu0 %v1337
    %1724 = vmatprep.subr.bf16.mxu0 0
    %1725 = vmatpush1.bf16.msra.mxu0 %v1338
    %1726 = vmatprep.subr.bf16.mxu0 0
    %1727 = vmatpush1.bf16.msra.mxu0 %v1339
    %1728 = vmatprep.subr.bf16.mxu0 0
    %1729 = vmatpush1.bf16.msra.mxu0 %v1340
    %1730 = vmatprep.subr.bf16.mxu0 0
    %1731 = vmatpush1.bf16.msra.mxu0 %v1341
    %1732 = vmatprep.subr.bf16.mxu0 0
    %1733 = vmatpush1.bf16.msra.mxu0 %v1342
    %1734 = vmatprep.subr.bf16.mxu0 0
    %1735 = vmatpush1.bf16.msra.mxu0 %v1343
    %1736 = vmatprep.subr.bf16.mxu0 0
    %1737 = vmatpush1.bf16.msra.mxu0 %v1344
    %1738 = vmatprep.subr.bf16.mxu0 0
    %1739 = vmatpush1.bf16.msra.mxu0 %v1345
    %1740 = vmatprep.subr.bf16.mxu0 0
    %1741 = vmatpush1.bf16.msra.mxu0 %v1346
    %1742 = vmatprep.subr.bf16.mxu0 0
    %1743 = vmatpush1.bf16.msra.mxu0 %v1347
    %1744 = vmatprep.subr.bf16.mxu0 0
    %1745 = vmatpush1.bf16.msra.mxu0 %v1348
    %1746 = vmatprep.subr.bf16.mxu0 0
    %1747 = vmatpush1.bf16.msra.mxu0 %v1349
    %1748 = vmatprep.subr.bf16.mxu0 0
    %1749 = vmatpush1.bf16.msra.mxu0 %v1350
    %1750 = vmatprep.subr.bf16.mxu0 0
    %1751 = vmatpush1.bf16.msra.mxu0 %v1351
    %1752 = vmatprep.mubr.bf16.mxu0 %v521
    %1753 = vmatmul.mubr.bf16.gmra.mrb[0].mxu0 %v520
    %v1754 = vpop.f32.mrb[0].mxu0
    %v1755 = vadd.f32 %v482, %v1754
    %v1756 = vpop.f32.mrb[0].mxu0
    %v1757 = vpop.f32.mrb[0].mxu0
    %v1758 = vpop.f32.mrb[0].mxu0
    %1759 = vdwg.mxu0
    %1760 = vmatprep.subr.bf16.mxu0 0
    %1761 = vmatpush1.bf16.msra.mxu0 %v1352
    %1762 = vmatprep.subr.bf16.mxu0 0
    %1763 = vmatpush1.bf16.msra.mxu0 %v1353
    %1764 = vmatprep.subr.bf16.mxu0 0
    %1765 = vmatpush1.bf16.msra.mxu0 %v1354
    %1766 = vmatprep.subr.bf16.mxu0 0
    %1767 = vmatpush1.bf16.msra.mxu0 %v1355
    %1768 = vmatprep.subr.bf16.mxu0 0
    %1769 = vmatpush1.bf16.msra.mxu0 %v1356
    %1770 = vmatprep.subr.bf16.mxu0 0
    %1771 = vmatpush1.bf16.msra.mxu0 %v1357
    %1772 = vmatprep.subr.bf16.mxu0 0
    %1773 = vmatpush1.bf16.msra.mxu0 %v1358
    %1774 = vmatprep.subr.bf16.mxu0 0
    %1775 = vmatpush1.bf16.msra.mxu0 %v1359
    %1776 = vmatprep.subr.bf16.mxu0 0
    %1777 = vmatpush1.bf16.msra.mxu0 %v1360
    %1778 = vmatprep.subr.bf16.mxu0 0
    %1779 = vmatpush1.bf16.msra.mxu0 %v1361
    %1780 = vmatprep.subr.bf16.mxu0 0
    %1781 = vmatpush1.bf16.msra.mxu0 %v1362
    %1782 = vmatprep.subr.bf16.mxu0 0
    %1783 = vmatpush1.bf16.msra.mxu0 %v1363
    %1784 = vmatprep.subr.bf16.mxu0 0
    %1785 = vmatpush1.bf16.msra.mxu0 %v1364
    %1786 = vmatprep.subr.bf16.mxu0 0
    %1787 = vmatpush1.bf16.msra.mxu0 %v1365
    %1788 = vmatprep.subr.bf16.mxu0 0
    %1789 = vmatpush1.bf16.msra.mxu0 %v1366
    %1790 = vmatprep.subr.bf16.mxu0 0
    %1791 = vmatpush1.bf16.msra.mxu0 %v1367
    %1792 = vmatprep.mubr.bf16.mxu0 %v523
    %1793 = vmatmul.mubr.bf16.gmra.mrb[0].mxu0 %v522
    %v1794 = vpop.f32.mrb[0].mxu0
    %v1795 = vadd.f32 %v1755, %v1794
    %v1796 = vpop.f32.mrb[0].mxu0
    %v1797 = vpop.f32.mrb[0].mxu0
    %v1798 = vpop.f32.mrb[0].mxu0
    %1799 = vdwg.mxu0
    %1800 = vmatprep.subr.bf16.mxu0 0
    %1801 = vmatpush1.bf16.msra.mxu0 %v1368
    %1802 = vmatprep.subr.bf16.mxu0 0
    %1803 = vmatpush1.bf16.msra.mxu0 %v1369
    %1804 = vmatprep.subr.bf16.mxu0 0
    %1805 = vmatpush1.bf16.msra.mxu0 %v1370
    %1806 = vmatprep.subr.bf16.mxu0 0
    %1807 = vmatpush1.bf16.msra.mxu0 %v1371
    %1808 = vmatprep.subr.bf16.mxu0 0
    %1809 = vmatpush1.bf16.msra.mxu0 %v1372
    %1810 = vmatprep.subr.bf16.mxu0 0
    %1811 = vmatpush1.bf16.msra.mxu0 %v1373
    %1812 = vmatprep.subr.bf16.mxu0 0
    %1813 = vmatpush1.bf16.msra.mxu0 %v1374
    %1814 = vmatprep.subr.bf16.mxu0 0
    %1815 = vmatpush1.bf16.msra.mxu0 %v1375
    %1816 = vmatprep.subr.bf16.mxu0 0
    %1817 = vmatpush1.bf16.msra.mxu0 %v1376
    %1818 = vmatprep.subr.bf16.mxu0 0
    %1819 = vmatpush1.bf16.msra.mxu0 %v1377
    %1820 = vmatprep.subr.bf16.mxu0 0
    %1821 = vmatpush1.bf16.msra.mxu0 %v1378
    %1822 = vmatprep.subr.bf16.mxu0 0
    %1823 = vmatpush1.bf16.msra.mxu0 %v1379
    %1824 = vmatprep.subr.bf16.mxu0 0
    %1825 = vmatpush1.bf16.msra.mxu0 %v1380
    %1826 = vmatprep.subr.bf16.mxu0 0
    %1827 = vmatpush1.bf16.msra.mxu0 %v1381
    %1828 = vmatprep.subr.bf16.mxu0 0
    %1829 = vmatpush1.bf16.msra.mxu0 %v1382
    %1830 = vmatprep.subr.bf16.mxu0 0
    %1831 = vmatpush1.bf16.msra.mxu0 %v1383
    %1832 = vmatprep.mubr.bf16.mxu0 %v525
    %1833 = vmatmul.mubr.bf16.gmra.mrb[0].mxu0 %v524
    %v1834 = vpop.f32.mrb[0].mxu0
    %v1835 = vadd.f32 %v1795, %v1834
    %v1836 = vpop.f32.mrb[0].mxu0
    %v1837 = vpop.f32.mrb[0].mxu0
    %v1838 = vpop.f32.mrb[0].mxu0
    %1839 = vdwg.mxu0
    %1840 = vmatprep.subr.bf16.mxu0 0
    %1841 = vmatpush1.bf16.msra.mxu0 %v1384
    %1842 = vmatprep.subr.bf16.mxu0 0
    %1843 = vmatpush1.bf16.msra.mxu0 %v1385
    %1844 = vmatprep.subr.bf16.mxu0 0
    %1845 = vmatpush1.bf16.msra.mxu0 %v1386
    %1846 = vmatprep.subr.bf16.mxu0 0
    %1847 = vmatpush1.bf16.msra.mxu0 %v1387
    %1848 = vmatprep.subr.bf16.mxu0 0
    %1849 = vmatpush1.bf16.msra.mxu0 %v1388
    %1850 = vmatprep.subr.bf16.mxu0 0
    %1851 = vmatpush1.bf16.msra.mxu0 %v1389
    %1852 = vmatprep.subr.bf16.mxu0 0
    %1853 = vmatpush1.bf16.msra.mxu0 %v1390
    %1854 = vmatprep.subr.bf16.mxu0 0
    %1855 = vmatpush1.bf16.msra.mxu0 %v1391
    %1856 = vmatprep.subr.bf16.mxu0 0
    %1857 = vmatpush1.bf16.msra.mxu0 %v1392
    %1858 = vmatprep.subr.bf16.mxu0 0
    %1859 = vmatpush1.bf16.msra.mxu0 %v1393
    %1860 = vmatprep.subr.bf16.mxu0 0
    %1861 = vmatpush1.bf16.msra.mxu0 %v1394
    %1862 = vmatprep.subr.bf16.mxu0 0
    %1863 = vmatpush1.bf16.msra.mxu0 %v1395
    %1864 = vmatprep.subr.bf16.mxu0 0
    %1865 = vmatpush1.bf16.msra.mxu0 %v1396
    %1866 = vmatprep.subr.bf16.mxu0 0
    %1867 = vmatpush1.bf16.msra.mxu0 %v1397
    %1868 = vmatprep.subr.bf16.mxu0 0
    %1869 = vmatpush1.bf16.msra.mxu0 %v1398
    %1870 = vmatprep.subr.bf16.mxu0 0
    %1871 = vmatpush1.bf16.msra.mxu0 %v1399
    %1872 = vmatprep.mubr.bf16.mxu0 %v527
    %1873 = vmatmul.mubr.bf16.gmra.mrb[0].mxu0 %v526
    %v1874 = vpop.f32.mrb[0].mxu0
    %v1875 = vadd.f32 %v1835, %v1874
    %v1876 = vpop.f32.mrb[0].mxu0
    %v1877 = vpop.f32.mrb[0].mxu0
    %v1878 = vpop.f32.mrb[0].mxu0
    %1879 = vdwg.mxu0
    %1880 = vmatprep.subr.bf16.mxu0 0
    %1881 = vmatpush1.bf16.msra.mxu0 %v1400
    %1882 = vmatprep.subr.bf16.mxu0 0
    %1883 = vmatpush1.bf16.msra.mxu0 %v1401
    %1884 = vmatprep.subr.bf16.mxu0 0
    %1885 = vmatpush1.bf16.msra.mxu0 %v1402
    %1886 = vmatprep.subr.bf16.mxu0 0
    %1887 = vmatpush1.bf16.msra.mxu0 %v1403
    %1888 = vmatprep.subr.bf16.mxu0 0
    %1889 = vmatpush1.bf16.msra.mxu0 %v1404
    %1890 = vmatprep.subr.bf16.mxu0 0
    %1891 = vmatpush1.bf16.msra.mxu0 %v1405
    %1892 = vmatprep.subr.bf16.mxu0 0
    %1893 = vmatpush1.bf16.msra.mxu0 %v1406
    %1894 = vmatprep.subr.bf16.mxu0 0
    %1895 = vmatpush1.bf16.msra.mxu0 %v1407
    %1896 = vmatprep.subr.bf16.mxu0 0
    %1897 = vmatpush1.bf16.msra.mxu0 %v1408
    %1898 = vmatprep.subr.bf16.mxu0 0
    %1899 = vmatpush1.bf16.msra.mxu0 %v1409
    %1900 = vmatprep.subr.bf16.mxu0 0
    %1901 = vmatpush1.bf16.msra.mxu0 %v1410
    %1902 = vmatprep.subr.bf16.mxu0 0
    %1903 = vmatpush1.bf16.msra.mxu0 %v1411
    %1904 = vmatprep.subr.bf16.mxu0 0
    %1905 = vmatpush1.bf16.msra.mxu0 %v1412
    %1906 = vmatprep.subr.bf16.mxu0 0
    %1907 = vmatpush1.bf16.msra.mxu0 %v1413
    %1908 = vmatprep.subr.bf16.mxu0 0
    %1909 = vmatpush1.bf16.msra.mxu0 %v1414
    %1910 = vmatprep.subr.bf16.mxu0 0
    %1911 = vmatpush1.bf16.msra.mxu0 %v1415
    %1912 = vmatprep.mubr.bf16.mxu0 %v529
    %1913 = vmatmul.mubr.bf16.gmra.mrb[0].mxu0 %v528
    %v1914 = vpop.f32.mrb[0].mxu0
    %v1915 = vadd.f32 %v1875, %v1914
    %v1916 = vpop.f32.mrb[0].mxu0
    %v1917 = vpop.f32.mrb[0].mxu0
    %v1918 = vpop.f32.mrb[0].mxu0
    %1919 = vdwg.mxu0
    %1920 = vmatprep.subr.bf16.mxu0 0
    %1921 = vmatpush1.bf16.msra.mxu0 %v1416
    %1922 = vmatprep.subr.bf16.mxu0 0
    %1923 = vmatpush1.bf16.msra.mxu0 %v1417
    %1924 = vmatprep.subr.bf16.mxu0 0
    %1925 = vmatpush1.bf16.msra.mxu0 %v1418
    %1926 = vmatprep.subr.bf16.mxu0 0
    %1927 = vmatpush1.bf16.msra.mxu0 %v1419
    %1928 = vmatprep.subr.bf16.mxu0 0
    %1929 = vmatpush1.bf16.msra.mxu0 %v1420
    %1930 = vmatprep.subr.bf16.mxu0 0
    %1931 = vmatpush1.bf16.msra.mxu0 %v1421
    %1932 = vmatprep.subr.bf16.mxu0 0
    %1933 = vmatpush1.bf16.msra.mxu0 %v1422
    %1934 = vmatprep.subr.bf16.mxu0 0
    %1935 = vmatpush1.bf16.msra.mxu0 %v1423
    %1936 = vmatprep.subr.bf16.mxu0 0
    %1937 = vmatpush1.bf16.msra.mxu0 %v1424
    %1938 = vmatprep.subr.bf16.mxu0 0
    %1939 = vmatpush1.bf16.msra.mxu0 %v1425
    %1940 = vmatprep.subr.bf16.mxu0 0
    %1941 = vmatpush1.bf16.msra.mxu0 %v1426
    %1942 = vmatprep.subr.bf16.mxu0 0
    %1943 = vmatpush1.bf16.msra.mxu0 %v1427
    %1944 = vmatprep.subr.bf16.mxu0 0
    %1945 = vmatpush1.bf16.msra.mxu0 %v1428
    %1946 = vmatprep.subr.bf16.mxu0 0
    %1947 = vmatpush1.bf16.msra.mxu0 %v1429
    %1948 = vmatprep.subr.bf16.mxu0 0
    %1949 = vmatpush1.bf16.msra.mxu0 %v1430
    %1950 = vmatprep.subr.bf16.mxu0 0
    %1951 = vmatpush1.bf16.msra.mxu0 %v1431
    %1952 = vmatprep.mubr.bf16.mxu0 %v531
    %1953 = vmatmul.mubr.bf16.gmra.mrb[0].mxu0 %v530
    %v1954 = vpop.f32.mrb[0].mxu0
    %v1955 = vadd.f32 %v1915, %v1954
    %v1956 = vpop.f32.mrb[0].mxu0
    %v1957 = vpop.f32.mrb[0].mxu0
    %v1958 = vpop.f32.mrb[0].mxu0
    %1959 = vdwg.mxu0
    %1960 = vmatprep.subr.bf16.mxu0 0
    %1961 = vmatpush1.bf16.msra.mxu0 %v1432
    %1962 = vmatprep.subr.bf16.mxu0 0
    %1963 = vmatpush1.bf16.msra.mxu0 %v1433
    %1964 = vmatprep.subr.bf16.mxu0 0
    %1965 = vmatpush1.bf16.msra.mxu0 %v1434
    %1966 = vmatprep.subr.bf16.mxu0 0
    %1967 = vmatpush1.bf16.msra.mxu0 %v1435
    %1968 = vmatprep.subr.bf16.mxu0 0
    %1969 = vmatpush1.bf16.msra.mxu0 %v1436
    %1970 = vmatprep.subr.bf16.mxu0 0
    %1971 = vmatpush1.bf16.msra.mxu0 %v1437
    %1972 = vmatprep.subr.bf16.mxu0 0
    %1973 = vmatpush1.bf16.msra.mxu0 %v1438
    %1974 = vmatprep.subr.bf16.mxu0 0
    %1975 = vmatpush1.bf16.msra.mxu0 %v1439
    %1976 = vmatprep.subr.bf16.mxu0 0
    %1977 = vmatpush1.bf16.msra.mxu0 %v1440
    %1978 = vmatprep.subr.bf16.mxu0 0
    %1979 = vmatpush1.bf16.msra.mxu0 %v1441
    %1980 = vmatprep.subr.bf16.mxu0 0
    %1981 = vmatpush1.bf16.msra.mxu0 %v1442
    %1982 = vmatprep.subr.bf16.mxu0 0
    %1983 = vmatpush1.bf16.msra.mxu0 %v1443
    %1984 = vmatprep.subr.bf16.mxu0 0
    %1985 = vmatpush1.bf16.msra.mxu0 %v1444
    %1986 = vmatprep.subr.bf16.mxu0 0
    %1987 = vmatpush1.bf16.msra.mxu0 %v1445
    %1988 = vmatprep.subr.bf16.mxu0 0
    %1989 = vmatpush1.bf16.msra.mxu0 %v1446
    %1990 = vmatprep.subr.bf16.mxu0 0
    %1991 = vmatpush1.bf16.msra.mxu0 %v1447
    %1992 = vmatprep.mubr.bf16.mxu0 %v533
    %1993 = vmatmul.mubr.bf16.gmra.mrb[0].mxu0 %v532
    %v1994 = vpop.f32.mrb[0].mxu0
    %v1995 = vadd.f32 %v1955, %v1994
    %v1996 = vpop.f32.mrb[0].mxu0
    %v1997 = vpop.f32.mrb[0].mxu0
    %v1998 = vpop.f32.mrb[0].mxu0
    %1999 = vdwg.mxu0
    %2000 = vmatprep.subr.bf16.mxu0 0
    %2001 = vmatpush1.bf16.msra.mxu0 %v1448
    %2002 = vmatprep.subr.bf16.mxu0 0
    %2003 = vmatpush1.bf16.msra.mxu0 %v1449
    %2004 = vmatprep.subr.bf16.mxu0 0
    %2005 = vmatpush1.bf16.msra.mxu0 %v1450
    %2006 = vmatprep.subr.bf16.mxu0 0
    %2007 = vmatpush1.bf16.msra.mxu0 %v1451
    %2008 = vmatprep.subr.bf16.mxu0 0
    %2009 = vmatpush1.bf16.msra.mxu0 %v1452
    %2010 = vmatprep.subr.bf16.mxu0 0
    %2011 = vmatpush1.bf16.msra.mxu0 %v1453
    %2012 = vmatprep.subr.bf16.mxu0 0
    %2013 = vmatpush1.bf16.msra.mxu0 %v1454
    %2014 = vmatprep.subr.bf16.mxu0 0
    %2015 = vmatpush1.bf16.msra.mxu0 %v1455
    %2016 = vmatprep.subr.bf16.mxu0 0
    %2017 = vmatpush1.bf16.msra.mxu0 %v1456
    %2018 = vmatprep.subr.bf16.mxu0 0
    %2019 = vmatpush1.bf16.msra.mxu0 %v1457
    %2020 = vmatprep.subr.bf16.mxu0 0
    %2021 = vmatpush1.bf16.msra.mxu0 %v1458
    %2022 = vmatprep.subr.bf16.mxu0 0
    %2023 = vmatpush1.bf16.msra.mxu0 %v1459
    %2024 = vmatprep.subr.bf16.mxu0 0
    %2025 = vmatpush1.bf16.msra.mxu0 %v1460
    %2026 = vmatprep.subr.bf16.mxu0 0
    %2027 = vmatpush1.bf16.msra.mxu0 %v1461
    %2028 = vmatprep.subr.bf16.mxu0 0
    %2029 = vmatpush1.bf16.msra.mxu0 %v1462
    %2030 = vmatprep.subr.bf16.mxu0 0
    %2031 = vmatpush1.bf16.msra.mxu0 %v1463
    %2032 = vmatprep.mubr.bf16.mxu0 %v535
    %2033 = vmatmul.mubr.bf16.gmra.mrb[0].mxu0 %v534
    %v2034 = vpop.f32.mrb[0].mxu0
    %v2035 = vadd.f32 %v1995, %v2034
    %v2036 = vpop.f32.mrb[0].mxu0
    %v2037 = vpop.f32.mrb[0].mxu0
    %v2038 = vpop.f32.mrb[0].mxu0
    %2039 = vdwg.mxu0
    %2040 = vmatprep.subr.bf16.mxu0 0
    %2041 = vmatpush1.bf16.msra.mxu0 %v1464
    %2042 = vmatprep.subr.bf16.mxu0 0
    %2043 = vmatpush1.bf16.msra.mxu0 %v1465
    %2044 = vmatprep.subr.bf16.mxu0 0
    %2045 = vmatpush1.bf16.msra.mxu0 %v1466
    %2046 = vmatprep.subr.bf16.mxu0 0
    %2047 = vmatpush1.bf16.msra.mxu0 %v1467
    %2048 = vmatprep.subr.bf16.mxu0 0
    %2049 = vmatpush1.bf16.msra.mxu0 %v1468
    %2050 = vmatprep.subr.bf16.mxu0 0
    %2051 = vmatpush1.bf16.msra.mxu0 %v1469
    %2052 = vmatprep.subr.bf16.mxu0 0
    %2053 = vmatpush1.bf16.msra.mxu0 %v1470
    %2054 = vmatprep.subr.bf16.mxu0 0
    %2055 = vmatpush1.bf16.msra.mxu0 %v1471
    %2056 = vmatprep.subr.bf16.mxu0 0
    %2057 = vmatpush1.bf16.msra.mxu0 %v1472
    %2058 = vmatprep.subr.bf16.mxu0 0
    %2059 = vmatpush1.bf16.msra.mxu0 %v1473
    %2060 = vmatprep.subr.bf16.mxu0 0
    %2061 = vmatpush1.bf16.msra.mxu0 %v1474
    %2062 = vmatprep.subr.bf16.mxu0 0
    %2063 = vmatpush1.bf16.msra.mxu0 %v1475
    %2064 = vmatprep.subr.bf16.mxu0 0
    %2065 = vmatpush1.bf16.msra.mxu0 %v1476
    %2066 = vmatprep.subr.bf16.mxu0 0
    %2067 = vmatpush1.bf16.msra.mxu0 %v1477
    %2068 = vmatprep.subr.bf16.mxu0 0
    %2069 = vmatpush1.bf16.msra.mxu0 %v1478
    %2070 = vmatprep.subr.bf16.mxu0 0
    %2071 = vmatpush1.bf16.msra.mxu0 %v1479
    %2072 = vmatprep.mubr.bf16.mxu0 %v537
    %2073 = vmatmul.mubr.bf16.gmra.mrb[0].mxu0 %v536
    %v2074 = vpop.f32.mrb[0].mxu0
    %v2075 = vadd.f32 %v2035, %v2074
    %v2076 = vpop.f32.mrb[0].mxu0
    %v2077 = vpop.f32.mrb[0].mxu0
    %v2078 = vpop.f32.mrb[0].mxu0
    %2079 = vdwg.mxu0
    %2080 = vmatprep.subr.bf16.mxu0 0
    %2081 = vmatpush1.bf16.msra.mxu0 %v1480
    %2082 = vmatprep.subr.bf16.mxu0 0
    %2083 = vmatpush1.bf16.msra.mxu0 %v1481
    %2084 = vmatprep.subr.bf16.mxu0 0
    %2085 = vmatpush1.bf16.msra.mxu0 %v1482
    %2086 = vmatprep.subr.bf16.mxu0 0
    %2087 = vmatpush1.bf16.msra.mxu0 %v1483
    %2088 = vmatprep.subr.bf16.mxu0 0
    %2089 = vmatpush1.bf16.msra.mxu0 %v1484
    %2090 = vmatprep.subr.bf16.mxu0 0
    %2091 = vmatpush1.bf16.msra.mxu0 %v1485
    %2092 = vmatprep.subr.bf16.mxu0 0
    %2093 = vmatpush1.bf16.msra.mxu0 %v1486
    %2094 = vmatprep.subr.bf16.mxu0 0
    %2095 = vmatpush1.bf16.msra.mxu0 %v1487
    %2096 = vmatprep.subr.bf16.mxu0 0
    %2097 = vmatpush1.bf16.msra.mxu0 %v1488
    %2098 = vmatprep.subr.bf16.mxu0 0
    %2099 = vmatpush1.bf16.msra.mxu0 %v1489
    %2100 = vmatprep.subr.bf16.mxu0 0
    %2101 = vmatpush1.bf16.msra.mxu0 %v1490
    %2102 = vmatprep.subr.bf16.mxu0 0
    %2103 = vmatpush1.bf16.msra.mxu0 %v1491
    %2104 = vmatprep.subr.bf16.mxu0 0
    %2105 = vmatpush1.bf16.msra.mxu0 %v1492
    %2106 = vmatprep.subr.bf16.mxu0 0
    %2107 = vmatpush1.bf16.msra.mxu0 %v1493
    %2108 = vmatprep.subr.bf16.mxu0 0
    %2109 = vmatpush1.bf16.msra.mxu0 %v1494
    %2110 = vmatprep.subr.bf16.mxu0 0
    %2111 = vmatpush1.bf16.msra.mxu0 %v1495
    %2112 = vmatprep.mubr.bf16.mxu0 %v539
    %2113 = vmatmul.mubr.bf16.gmra.mrb[0].mxu0 %v538
    %v2114 = vpop.f32.mrb[0].mxu0
    %v2115 = vadd.f32 %v2075, %v2114
    %v2116 = vpop.f32.mrb[0].mxu0
    %v2117 = vpop.f32.mrb[0].mxu0
    %v2118 = vpop.f32.mrb[0].mxu0
    %2119 = vdwg.mxu0
    %2120 = vmatprep.subr.bf16.mxu0 0
    %2121 = vmatpush1.bf16.msra.mxu0 %v1496
    %2122 = vmatprep.subr.bf16.mxu0 0
    %2123 = vmatpush1.bf16.msra.mxu0 %v1497
    %2124 = vmatprep.subr.bf16.mxu0 0
    %2125 = vmatpush1.bf16.msra.mxu0 %v1498
    %2126 = vmatprep.subr.bf16.mxu0 0
    %2127 = vmatpush1.bf16.msra.mxu0 %v1499
    %2128 = vmatprep.subr.bf16.mxu0 0
    %2129 = vmatpush1.bf16.msra.mxu0 %v1500
    %2130 = vmatprep.subr.bf16.mxu0 0
    %2131 = vmatpush1.bf16.msra.mxu0 %v1501
    %2132 = vmatprep.subr.bf16.mxu0 0
    %2133 = vmatpush1.bf16.msra.mxu0 %v1502
    %2134 = vmatprep.subr.bf16.mxu0 0
    %2135 = vmatpush1.bf16.msra.mxu0 %v1503
    %2136 = vmatprep.subr.bf16.mxu0 0
    %2137 = vmatpush1.bf16.msra.mxu0 %v1504
    %2138 = vmatprep.subr.bf16.mxu0 0
    %2139 = vmatpush1.bf16.msra.mxu0 %v1505
    %2140 = vmatprep.subr.bf16.mxu0 0
    %2141 = vmatpush1.bf16.msra.mxu0 %v1506
    %2142 = vmatprep.subr.bf16.mxu0 0
    %2143 = vmatpush1.bf16.msra.mxu0 %v1507
    %2144 = vmatprep.subr.bf16.mxu0 0
    %2145 = vmatpush1.bf16.msra.mxu0 %v1508
    %2146 = vmatprep.subr.bf16.mxu0 0
    %2147 = vmatpush1.bf16.msra.mxu0 %v1509
    %2148 = vmatprep.subr.bf16.mxu0 0
    %2149 = vmatpush1.bf16.msra.mxu0 %v1510
    %2150 = vmatprep.subr.bf16.mxu0 0
    %2151 = vmatpush1.bf16.msra.mxu0 %v1511
    %2152 = vmatprep.mubr.bf16.mxu0 %v541
    %2153 = vmatmul.mubr.bf16.gmra.mrb[0].mxu0 %v540
    %v2154 = vpop.f32.mrb[0].mxu0
    %v2155 = vadd.f32 %v2115, %v2154
    %v2156 = vpop.f32.mrb[0].mxu0
    %v2157 = vpop.f32.mrb[0].mxu0
    %v2158 = vpop.f32.mrb[0].mxu0
    %2159 = vdwg.mxu0
    %2160 = vmatprep.subr.bf16.mxu0 0
    %2161 = vmatpush1.bf16.msra.mxu0 %v1512
    %2162 = vmatprep.subr.bf16.mxu0 0
    %2163 = vmatpush1.bf16.msra.mxu0 %v1513
    %2164 = vmatprep.subr.bf16.mxu0 0
    %2165 = vmatpush1.bf16.msra.mxu0 %v1514
    %2166 = vmatprep.subr.bf16.mxu0 0
    %2167 = vmatpush1.bf16.msra.mxu0 %v1515
    %2168 = vmatprep.subr.bf16.mxu0 0
    %2169 = vmatpush1.bf16.msra.mxu0 %v1516
    %2170 = vmatprep.subr.bf16.mxu0 0
    %2171 = vmatpush1.bf16.msra.mxu0 %v1517
    %2172 = vmatprep.subr.bf16.mxu0 0
    %2173 = vmatpush1.bf16.msra.mxu0 %v1518
    %2174 = vmatprep.subr.bf16.mxu0 0
    %2175 = vmatpush1.bf16.msra.mxu0 %v1519
    %2176 = vmatprep.subr.bf16.mxu0 0
    %2177 = vmatpush1.bf16.msra.mxu0 %v1520
    %2178 = vmatprep.subr.bf16.mxu0 0
    %2179 = vmatpush1.bf16.msra.mxu0 %v1521
    %2180 = vmatprep.subr.bf16.mxu0 0
    %2181 = vmatpush1.bf16.msra.mxu0 %v1522
    %2182 = vmatprep.subr.bf16.mxu0 0
    %2183 = vmatpush1.bf16.msra.mxu0 %v1523
    %2184 = vmatprep.subr.bf16.mxu0 0
    %2185 = vmatpush1.bf16.msra.mxu0 %v1524
    %2186 = vmatprep.subr.bf16.mxu0 0
    %2187 = vmatpush1.bf16.msra.mxu0 %v1525
    %2188 = vmatprep.subr.bf16.mxu0 0
    %2189 = vmatpush1.bf16.msra.mxu0 %v1526
    %2190 = vmatprep.subr.bf16.mxu0 0
    %2191 = vmatpush1.bf16.msra.mxu0 %v1527
    %2192 = vmatprep.mubr.bf16.mxu0 %v543
    %2193 = vmatmul.mubr.bf16.gmra.mrb[0].mxu0 %v542
    %v2194 = vpop.f32.mrb[0].mxu0
    %v2195 = vadd.f32 %v2155, %v2194
    %v2196 = vpop.f32.mrb[0].mxu0
    %v2197 = vpop.f32.mrb[0].mxu0
    %v2198 = vpop.f32.mrb[0].mxu0
    %2199 = vdwg.mxu0
    %v2200 = vmax.f32 %v2195, 0.0
    %v2201 = vpack.c.bf16 %v2200, %v2200
    %v2202 = vld [vmem:[#allocation7] sm:$0xf]
    %v2203 = vld [vmem:[#allocation7 + $0x4] sm:$0xf]
    %v2204 = vld [vmem:[#allocation7 + $0x8] sm:$0xf]
    %v2205 = vld [vmem:[#allocation7 + $0xc] sm:$0xf]
    %v2206 = vld [vmem:[#allocation7 + $0x10] sm:$0xf]
    %v2207 = vld [vmem:[#allocation7 + $0x14] sm:$0xf]
    %v2208 = vld [vmem:[#allocation7 + $0x18] sm:$0xf]
    %v2209 = vld [vmem:[#allocation7 + $0x1c] sm:$0xf]
    %v2210 = vld [vmem:[#allocation7 + $0x20] sm:$0xf]
    %v2211 = vld [vmem:[#allocation7 + $0x24] sm:$0xf]
    %v2212 = vld [vmem:[#allocation7 + $0x28] sm:$0xf]
    %v2213 = vld [vmem:[#allocation7 + $0x2c] sm:$0xf]
    %v2214 = vld [vmem:[#allocation7 + $0x30] sm:$0xf]
    %v2215 = vld [vmem:[#allocation7 + $0x34] sm:$0xf]
    %v2216 = vld [vmem:[#allocation7 + $0x38] sm:$0xf]
    %v2217 = vld [vmem:[#allocation7 + $0x3c] sm:$0xf]
    %v2218 = vld [vmem:[%s4] sm:$0x1]
    %v2220 = vlaneseq
    %v2221 = vshrl.u32 %v2220, 7
    %v2222 = vsub.s32 0, %v2221
    %v2223 = vrot.slane %v2218, %v2222
    %v2241 = vunpack.c.l.b16 %v2202
    %v2242 = vunpack.c.l.b16 %v2203
    %v2243 = vunpack.c.l.b16 %v2204
    %v2244 = vunpack.c.l.b16 %v2205
    %v2245 = vunpack.c.l.b16 %v2206
    %v2246 = vunpack.c.l.b16 %v2207
    %v2247 = vunpack.c.l.b16 %v2208
    %v2248 = vunpack.c.l.b16 %v2209
    %v2249 = vunpack.c.l.b16 %v2210
    %v2250 = vunpack.c.l.b16 %v2211
    %v2251 = vunpack.c.l.b16 %v2212
    %v2252 = vunpack.c.l.b16 %v2213
    %v2253 = vunpack.c.l.b16 %v2214
    %v2254 = vunpack.c.l.b16 %v2215
    %v2255 = vunpack.c.l.b16 %v2216
    %v2256 = vunpack.c.l.b16 %v2217
    %v2257 = vpack.c.b16 %v2242, %v2241
    %v2258 = vpack.c.b16 %v2244, %v2243
    %v2259 = vpack.c.b16 %v2246, %v2245
    %v2260 = vpack.c.b16 %v2248, %v2247
    %v2261 = vpack.c.b16 %v2250, %v2249
    %v2262 = vpack.c.b16 %v2252, %v2251
    %v2263 = vpack.c.b16 %v2254, %v2253
    %v2264 = vpack.c.b16 %v2256, %v2255
    %2273 = vmatprep.subr.bf16.mxu0 0
    %2274 = vmatpush1.bf16.msra.mxu0 %v2257
    %2275 = vmatprep.subr.bf16.mxu0 0
    %2276 = vmatpush1.bf16.msra.mxu0 %v2258
    %2277 = vmatprep.subr.bf16.mxu0 0
    %2278 = vmatpush1.bf16.msra.mxu0 %v2259
    %2279 = vmatprep.subr.bf16.mxu0 0
    %2280 = vmatpush1.bf16.msra.mxu0 %v2260
    %2281 = vmatprep.subr.bf16.mxu0 0
    %2282 = vmatpush1.bf16.msra.mxu0 %v2261
    %2283 = vmatprep.subr.bf16.mxu0 0
    %2284 = vmatpush1.bf16.msra.mxu0 %v2262
    %2285 = vmatprep.subr.bf16.mxu0 0
    %2286 = vmatpush1.bf16.msra.mxu0 %v2263
    %2287 = vmatprep.subr.bf16.mxu0 0
    %2288 = vmatpush1.bf16.msra.mxu0 %v2264
    %2289 = vmatprep.subr.bf16.mxu0 0
    %2290 = vmatpush1.bf16.msra.mxu0 0
    %2291 = vmatprep.subr.bf16.mxu0 0
    %2292 = vmatpush1.bf16.msra.mxu0 0
    %2293 = vmatprep.subr.bf16.mxu0 0
    %2294 = vmatpush1.bf16.msra.mxu0 0
    %2295 = vmatprep.subr.bf16.mxu0 0
    %2296 = vmatpush1.bf16.msra.mxu0 0
    %2297 = vmatprep.subr.bf16.mxu0 0
    %2298 = vmatpush1.bf16.msra.mxu0 0
    %2299 = vmatprep.subr.bf16.mxu0 0
    %2300 = vmatpush1.bf16.msra.mxu0 0
    %2301 = vmatprep.subr.bf16.mxu0 0
    %2302 = vmatpush1.bf16.msra.mxu0 0
    %2303 = vmatprep.subr.bf16.mxu0 0
    %2304 = vmatpush1.bf16.msra.mxu0 0
    %2305 = vmatprep.mubr.bf16.mxu0 0
    %2306 = vmatmul.mubr.bf16.gmra.mrb[0].mxu0 %v2201
    %v2307 = vpop.f32.mrb[0].mxu0
    %v2308 = vadd.f32 %v2223, %v2307
    %v2309 = vpop.f32.mrb[0].mxu0
    %v2310 = vpop.f32.mrb[0].mxu0
    %v2311 = vpop.f32.mrb[0].mxu0
    %2312 = vdwg.mxu0
    %v2313 = vmax.f32 %v2308, 0.0
    %v2314 = vpack.c.bf16 %v2313, %v2313
    %v2315 = vld [vmem:[#allocation8] sm:$0xf]
    %v2316 = vld [vmem:[#allocation8 + $0x4] sm:$0xf]
    %v2317 = vld [vmem:[#allocation8 + $0x8] sm:$0xf]
    %v2318 = vld [vmem:[#allocation8 + $0xc] sm:$0xf]
    %v2319 = vld [vmem:[#allocation8 + $0x10] sm:$0xf]
    %v2320 = vld [vmem:[#allocation8 + $0x14] sm:$0xf]
    %v2321 = vld [vmem:[#allocation8 + $0x18] sm:$0xf]
    %v2322 = vld [vmem:[#allocation8 + $0x1c] sm:$0xf]
    %v2323 = vld [vmem:[#allocation8 + $0x20] sm:$0xf]
    %v2324 = vld [vmem:[#allocation8 + $0x24] sm:$0xf]
    %v2325 = vld [vmem:[#allocation8 + $0x28] sm:$0xf]
    %v2326 = vld [vmem:[#allocation8 + $0x2c] sm:$0xf]
    %v2327 = vld [vmem:[#allocation8 + $0x30] sm:$0xf]
    %v2328 = vld [vmem:[#allocation8 + $0x34] sm:$0xf]
    %v2329 = vld [vmem:[#allocation8 + $0x38] sm:$0xf]
    %v2330 = vld [vmem:[#allocation8 + $0x3c] sm:$0xf]
    %v2331 = vld [vmem:[%s6] sm:$0x1]
    %v2333 = vlaneseq
    %v2334 = vshrl.u32 %v2333, 7
    %v2335 = vsub.s32 0, %v2334
    %v2336 = vrot.slane %v2331, %v2335
    %v2354 = vunpack.c.l.b16 %v2315
    %v2355 = vunpack.c.l.b16 %v2316
    %v2356 = vunpack.c.l.b16 %v2317
    %v2357 = vunpack.c.l.b16 %v2318
    %v2358 = vunpack.c.l.b16 %v2319
    %v2359 = vunpack.c.l.b16 %v2320
    %v2360 = vunpack.c.l.b16 %v2321
    %v2361 = vunpack.c.l.b16 %v2322
    %v2362 = vunpack.c.l.b16 %v2323
    %v2363 = vunpack.c.l.b16 %v2324
    %v2364 = vunpack.c.l.b16 %v2325
    %v2365 = vunpack.c.l.b16 %v2326
    %v2366 = vunpack.c.l.b16 %v2327
    %v2367 = vunpack.c.l.b16 %v2328
    %v2368 = vunpack.c.l.b16 %v2329
    %v2369 = vunpack.c.l.b16 %v2330
    %v2370 = vpack.c.b16 %v2355, %v2354
    %v2371 = vpack.c.b16 %v2357, %v2356
    %v2372 = vpack.c.b16 %v2359, %v2358
    %v2373 = vpack.c.b16 %v2361, %v2360
    %v2374 = vpack.c.b16 %v2363, %v2362
    %v2375 = vpack.c.b16 %v2365, %v2364
    %v2376 = vpack.c.b16 %v2367, %v2366
    %v2377 = vpack.c.b16 %v2369, %v2368
    %2386 = vmatprep.subr.bf16.mxu0 0
    %2387 = vmatpush1.bf16.msra.mxu0 %v2370
    %2388 = vmatprep.subr.bf16.mxu0 0
    %2389 = vmatpush1.bf16.msra.mxu0 %v2371
    %2390 = vmatprep.subr.bf16.mxu0 0
    %2391 = vmatpush1.bf16.msra.mxu0 %v2372
    %2392 = vmatprep.subr.bf16.mxu0 0
    %2393 = vmatpush1.bf16.msra.mxu0 %v2373
    %2394 = vmatprep.subr.bf16.mxu0 0
    %2395 = vmatpush1.bf16.msra.mxu0 %v2374
    %2396 = vmatprep.subr.bf16.mxu0 0
    %2397 = vmatpush1.bf16.msra.mxu0 %v2375
    %2398 = vmatprep.subr.bf16.mxu0 0
    %2399 = vmatpush1.bf16.msra.mxu0 %v2376
    %2400 = vmatprep.subr.bf16.mxu0 0
    %2401 = vmatpush1.bf16.msra.mxu0 %v2377
    %2402 = vmatprep.subr.bf16.mxu0 0
    %2403 = vmatpush1.bf16.msra.mxu0 0
    %2404 = vmatprep.subr.bf16.mxu0 0
    %2405 = vmatpush1.bf16.msra.mxu0 0
    %2406 = vmatprep.subr.bf16.mxu0 0
    %2407 = vmatpush1.bf16.msra.mxu0 0
    %2408 = vmatprep.subr.bf16.mxu0 0
    %2409 = vmatpush1.bf16.msra.mxu0 0
    %2410 = vmatprep.subr.bf16.mxu0 0
    %2411 = vmatpush1.bf16.msra.mxu0 0
    %2412 = vmatprep.subr.bf16.mxu0 0
    %2413 = vmatpush1.bf16.msra.mxu0 0
    %2414 = vmatprep.subr.bf16.mxu0 0
    %2415 = vmatpush1.bf16.msra.mxu0 0
    %2416 = vmatprep.subr.bf16.mxu0 0
    %2417 = vmatpush1.bf16.msra.mxu0 0
    %2418 = vmatprep.mubr.bf16.mxu0 0
    %2419 = vmatmul.mubr.bf16.gmra.mrb[0].mxu0 %v2314
    %v2420 = vpop.f32.mrb[0].mxu0
    %v2421 = vadd.f32 %v2336, %v2420
    %v2422 = vpop.f32.mrb[0].mxu0
    %v2423 = vpop.f32.mrb[0].mxu0
    %v2424 = vpop.f32.mrb[0].mxu0
    %2425 = vdwg.mxu0
    %2426 = vst [vmem:[#allocation10] sm:$0xff] %v2421
    // Predicated region
    $region46: #{tpu_custom_call.1} parent=1 // pred_check
      _
    $region47: #{tpu_custom_call.1} parent=1 // pred_check_branch
      %2428 = sbr.rel (0) target = $region49
    $region48: #{tpu_custom_call.1} parent=1 // pred_region
      %s2430 = ssub.s32 128, 128
      %2431 = vsyncadd [#allocation4], %s2430
      %s2433 = sshll.u32 [#allocation10], 4
      %s2434 = int_to_ptr.vmem [resolvable:$true] %s2433
      %2436 = dma.vmem_to_hbm [thread:$0]  %s2434, 128, %s7, [#allocation4]
    $region49: #{tpu_custom_call.1} parent=1 // pred_fallthru
      _
    // Predicated region
    $region50: #{tpu_custom_call.1} parent=1 // pred_check
      _
    $region51: #{tpu_custom_call.1} parent=1 // pred_check_branch
      %2438 = sbr.rel (0) target = $region53
    $region52: #{tpu_custom_call.1} parent=1 // pred_region
      %2439 = dma.done [#allocation4], 128
    $region53: #{tpu_custom_call.1} parent=1 // pred_fallthru
      _
    %2440 = vsyncpa [#allocation3], 1
    %2441 = vsyncpa [#allocation6], 1
    %2442 = vsyncpa [#allocation9], 1
    %2443 = vsyncpa [#allocation4], 1

</llo_original>
